<compile_context>
chip_gen: v7x
topology: tpu7x:2x2x1
jax: 0.10.0
libtpu: 0.0.40
codegen_flags: <defaults>
</compile_context>

<pallas_src>
import functools

import jax
import jax.numpy as jnp
from jax.experimental import pallas as pl
from jax.experimental.pallas import tpu as pltpu


def _round_up(x, m):
    return ((x + m - 1) // m) * m


def _nerf_mlp_kernel(x_ref, w1_ref, b1_ref, w2_ref, b2_ref, w3_ref, b3_ref,
                     o_ref):
    cdt = w1_ref.dtype  # compute (MXU operand) dtype, e.g. bf16

    # Layer 1: cast the f32 input tile to the MXU dtype in-vreg, contract the
    # un-padded K=78 dim, accumulate in f32, bias + ReLU in f32.
    x = x_ref[...].astype(cdt)
    h = jnp.dot(x, w1_ref[...], preferred_element_type=jnp.float32)
    h = jnp.maximum(h + b1_ref[...], 0.0)

    # Layer 2.
    h = jnp.dot(h.astype(cdt), w2_ref[...], preferred_element_type=jnp.float32)
    h = jnp.maximum(h + b2_ref[...], 0.0)

    # Layer 3: (tile, 128) @ (128, 4) + (1, 4); output stays 4-wide — its
    # write traffic (16 B/sample) is negligible next to the 312 B/sample read.
    out = jnp.dot(h.astype(cdt), w3_ref[...], preferred_element_type=jnp.float32)
    o_ref[...] = (out + b3_ref[...]).astype(o_ref.dtype)


@functools.partial(jax.jit, static_argnames=("tile_n", "compute_dtype"))
def very_tiny_nerf_forward(x, w1, b1, w2, b2, w3, b3, *, tile_n=4096,
                           compute_dtype=jnp.bfloat16):
    n, d_in = x.shape
    f = w1.shape[1]
    d_out = w3.shape[1]

    # Row tile: multiple of 256 (keeps MXU M-dim / (8,128) blocks happy),
    # clamped so tiny demo batches don't over-allocate.  N need NOT divide it.
    tile = min(_round_up(tile_n, 256), _round_up(n, 256))
    grid = (pl.cdiv(n, tile),)

    # Weights are tiny (~66 KB in bf16): casting them is negligible and they
    # stay VMEM-resident across the whole grid (constant index_map).
    w1_c = w1.astype(compute_dtype)
    w2_c = w2.astype(compute_dtype)
    w3_c = w3.astype(compute_dtype)
    b1_f = b1.astype(jnp.float32).reshape(1, f)
    b2_f = b2.astype(jnp.float32).reshape(1, f)
    b3_f = b3.astype(jnp.float32).reshape(1, d_out)

    rep = lambda shape: pl.BlockSpec(shape, lambda i: (0, 0))

    out = pl.pallas_call(
        _nerf_mlp_kernel,
        out_shape=jax.ShapeDtypeStruct((n, d_out), jnp.float32),
        grid_spec=pltpu.PrefetchScalarGridSpec(
            num_scalar_prefetch=0,
            grid=grid,
            in_specs=[
                pl.BlockSpec((tile, d_in), lambda i: (i, 0)),  # x tile (f32, un-padded)
                rep((d_in, f)),                                # W1
                rep((1, f)),                                   # b1 (f32)
                rep((f, f)),                                   # W2
                rep((1, f)),                                   # b2 (f32)
                rep((f, d_out)),                               # W3
                rep((1, d_out)),                               # b3 (f32)
            ],
            out_specs=pl.BlockSpec((tile, d_out), lambda i: (i, 0)),
        ),
        compiler_params=pltpu.CompilerParams(
            dimension_semantics=("parallel",),      # megacore-shard the 1-D grid
            vmem_limit_bytes=32 * 1024 * 1024,      # headroom for tile=4096 on v5e
        ),
    )(x, w1_c, b1_f, w2_c, b2_f, w3_c, b3_f)

    return out


def init_params(key, filter_size=128, num_encoding_functions=6,
                use_viewdirs=True, dtype=jnp.float32):
    """Deterministic init mimicking torch.nn.Linear's U(-1/sqrt(fan_in), +)."""
    xyz_dims = 3 + 3 * 2 * num_encoding_functions
    view_dims = xyz_dims if use_viewdirs else 0
    d_in = xyz_dims + view_dims

    def linear(k, fan_in, fan_out):
        kw, kb = jax.random.split(k)
        bound = 1.0 / jnp.sqrt(fan_in)
        w = jax.random.uniform(kw, (fan_in, fan_out), dtype, -bound, bound)
        b = jax.random.uniform(kb, (1, fan_out), dtype, -bound, bound)
        return w, b

    k1, k2, k3 = jax.random.split(key, 3)
    w1, b1 = linear(k1, d_in, filter_size)
    w2, b2 = linear(k2, filter_size, filter_size)
    w3, b3 = linear(k3, filter_size, 4)
    return d_in, (w1, b1, w2, b2, w3, b3)


def reference_forward(x, w1, b1, w2, b2, w3, b3):
    h = jnp.maximum(x @ w1 + b1, 0.0)
    h = jnp.maximum(h @ w2 + b2, 0.0)
    return h @ w3 + b3


def reference_forward_bf16(x, w1, b1, w2, b2, w3, b3):
    """Same rounding as the kernel: bf16 operands, f32 accumulation."""
    bf = jnp.bfloat16
    h = jnp.dot(x.astype(bf), w1.astype(bf), preferred_element_type=jnp.float32)
    h = jnp.maximum(h + b1, 0.0)
    h = jnp.dot(h.astype(bf), w2.astype(bf), preferred_element_type=jnp.float32)
    h = jnp.maximum(h + b2, 0.0)
    out = jnp.dot(h.astype(bf), w3.astype(bf), preferred_element_type=jnp.float32)
    return out + b3


if __name__ == "__main__":
    key = jax.random.PRNGKey(0)
    k_params, k_x = jax.random.split(key)

    filter_size = 128
    num_encoding_functions = 6
    d_in, params = init_params(
        k_params,
        filter_size=filter_size,
        num_encoding_functions=num_encoding_functions,
        use_viewdirs=True,
    )

    # A small batch of encoded NeRF samples: (N, 78).
    # N deliberately NOT a multiple of the tile to exercise the partial-block path.
    n = 1000
    x = jax.random.normal(k_x, (n, d_in), dtype=jnp.float32)

    # Small tile for the demo so the grid has >1 step (and a partial last block);
    # production batches (rays * samples, usually >= 64K) should use the
    # default tile_n=4096.
    out = very_tiny_nerf_forward(x, *params, tile_n=512)
    out = jax.block_until_ready(out)

    assert out.shape == (n, 4), out.shape

    # Tight check vs a reference that applies the same bf16 rounding.
    ref_bf16 = reference_forward_bf16(x, *params)
    assert jnp.allclose(out, ref_bf16, atol=1e-2, rtol=1e-2), \
        "mismatch vs bf16 reference"

    # Loose check vs the pure-f32 reference (bf16 matmul error budget).
    ref = reference_forward(x, *params)
    assert jnp.allclose(out, ref, atol=7.5e-2, rtol=5e-2), \
        "mismatch vs f32 reference"

    print("KERNEL_OK")
</pallas_src>

<mosaic_0001>
module attributes {stable_mosaic.version = 11 : i64} {
  func.func @_nerf_mlp_kernel(%arg0: i32, %arg1: memref<512x78xf32, #tpu.memory_space<vmem>>, %arg2: memref<78x128xbf16, #tpu.memory_space<vmem>>, %arg3: memref<1x128xf32, #tpu.memory_space<vmem>>, %arg4: memref<128x128xbf16, #tpu.memory_space<vmem>>, %arg5: memref<1x128xf32, #tpu.memory_space<vmem>>, %arg6: memref<128x4xbf16, #tpu.memory_space<vmem>>, %arg7: memref<1x4xf32, #tpu.memory_space<vmem>>, %arg8: memref<512x4xf32, #tpu.memory_space<vmem>>) attributes {dimension_semantics = [#tpu.dimension_semantics<parallel>], iteration_bounds = array<i64: 2>, scalar_prefetch = 0 : i64, scratch_operands = 0 : i64, tpu.core_type = #tpu.core_type<tc>, window_params = [{transform_indices = @transform_0, window_bounds = array<i64: 512, 78>}, {pipeline_mode = #tpu.pipeline_mode<synchronous>, transform_indices = @transform_1, window_bounds = array<i64: 78, 128>}, {pipeline_mode = #tpu.pipeline_mode<synchronous>, transform_indices = @transform_2, window_bounds = array<i64: 1, 128>}, {pipeline_mode = #tpu.pipeline_mode<synchronous>, transform_indices = @transform_3, window_bounds = array<i64: 128, 128>}, {pipeline_mode = #tpu.pipeline_mode<synchronous>, transform_indices = @transform_4, window_bounds = array<i64: 1, 128>}, {pipeline_mode = #tpu.pipeline_mode<synchronous>, transform_indices = @transform_5, window_bounds = array<i64: 128, 4>}, {pipeline_mode = #tpu.pipeline_mode<synchronous>, transform_indices = @transform_6, window_bounds = array<i64: 1, 4>}, {transform_indices = @transform_7, window_bounds = array<i64: 512, 4>}]} {
    %c0 = arith.constant 0 : index
    %c0_0 = arith.constant 0 : index
    %0 = vector.load %arg1[%c0, %c0_0] : memref<512x78xf32, #tpu.memory_space<vmem>>, vector<512x78xf32>
    %1 = arith.truncf %0 : vector<512x78xf32> to vector<512x78xbf16>
    %c0_1 = arith.constant 0 : index
    %c0_2 = arith.constant 0 : index
    %2 = vector.load %arg2[%c0_1, %c0_2] : memref<78x128xbf16, #tpu.memory_space<vmem>>, vector<78x128xbf16>
    %cst = arith.constant dense<0.000000e+00> : vector<512x128xf32>
    %3 = tpu.matmul %1, %2, %cst {dimension_numbers = #tpu.dot_dimension_numbers<[1], [0], [0], [1], [0, 0, 1, 1], [], []>} : vector<512x78xbf16>, vector<78x128xbf16>, vector<512x128xf32> -> vector<512x128xf32>
    %c0_3 = arith.constant 0 : index
    %c0_4 = arith.constant 0 : index
    %4 = vector.load %arg3[%c0_3, %c0_4] : memref<1x128xf32, #tpu.memory_space<vmem>>, vector<1x128xf32>
    %5 = vector.broadcast %4 : vector<1x128xf32> to vector<512x128xf32>
    %6 = arith.addf %3, %5 : vector<512x128xf32>
    %cst_5 = arith.constant 0.000000e+00 : f32
    %7 = vector.broadcast %cst_5 : f32 to vector<512x128xf32>
    %8 = arith.maximumf %6, %7 : vector<512x128xf32>
    %9 = arith.truncf %8 : vector<512x128xf32> to vector<512x128xbf16>
    %c0_6 = arith.constant 0 : index
    %c0_7 = arith.constant 0 : index
    %10 = vector.load %arg4[%c0_6, %c0_7] : memref<128x128xbf16, #tpu.memory_space<vmem>>, vector<128x128xbf16>
    %cst_8 = arith.constant dense<0.000000e+00> : vector<512x128xf32>
    %11 = tpu.matmul %9, %10, %cst_8 {dimension_numbers = #tpu.dot_dimension_numbers<[1], [0], [0], [1], [0, 0, 1, 1], [], []>} : vector<512x128xbf16>, vector<128x128xbf16>, vector<512x128xf32> -> vector<512x128xf32>
    %c0_9 = arith.constant 0 : index
    %c0_10 = arith.constant 0 : index
    %12 = vector.load %arg5[%c0_9, %c0_10] : memref<1x128xf32, #tpu.memory_space<vmem>>, vector<1x128xf32>
    %13 = vector.broadcast %12 : vector<1x128xf32> to vector<512x128xf32>
    %14 = arith.addf %11, %13 : vector<512x128xf32>
    %cst_11 = arith.constant 0.000000e+00 : f32
    %15 = vector.broadcast %cst_11 : f32 to vector<512x128xf32>
    %16 = arith.maximumf %14, %15 : vector<512x128xf32>
    %17 = arith.truncf %16 : vector<512x128xf32> to vector<512x128xbf16>
    %c0_12 = arith.constant 0 : index
    %c0_13 = arith.constant 0 : index
    %18 = vector.load %arg6[%c0_12, %c0_13] : memref<128x4xbf16, #tpu.memory_space<vmem>>, vector<128x4xbf16>
    %cst_14 = arith.constant dense<0.000000e+00> : vector<512x4xf32>
    %19 = tpu.matmul %17, %18, %cst_14 {dimension_numbers = #tpu.dot_dimension_numbers<[1], [0], [0], [1], [0, 0, 1, 1], [], []>} : vector<512x128xbf16>, vector<128x4xbf16>, vector<512x4xf32> -> vector<512x4xf32>
    %c0_15 = arith.constant 0 : index
    %c0_16 = arith.constant 0 : index
    %20 = vector.load %arg7[%c0_15, %c0_16] : memref<1x4xf32, #tpu.memory_space<vmem>>, vector<1x4xf32>
    %21 = vector.broadcast %20 : vector<1x4xf32> to vector<512x4xf32>
    %22 = arith.addf %19, %21 : vector<512x4xf32>
    %c0_17 = arith.constant 0 : index
    %c0_18 = arith.constant 0 : index
    %23 = vector.load %arg8[%c0_17, %c0_18] : memref<512x4xf32, #tpu.memory_space<vmem>>, vector<512x4xf32>
    tpu.vector_store %arg8[%c0_17, %c0_18], %22 {strides = array<i32>} : memref<512x4xf32, #tpu.memory_space<vmem>>, vector<512x4xf32>,
    return
  }
  func.func @transform_0(%arg0: i32) -> (i32, i32) {
    %c0_i32 = arith.constant 0 : i32
    %c0_i32_0 = arith.constant 0 : i32
    return %arg0, %c0_i32 : i32, i32
  }
  func.func @transform_1(%arg0: i32) -> (i32, i32) {
    %c0_i32 = arith.constant 0 : i32
    %c0_i32_0 = arith.constant 0 : i32
    %c0_i32_1 = arith.constant 0 : i32
    return %c0_i32, %c0_i32_0 : i32, i32
  }
  func.func @transform_2(%arg0: i32) -> (i32, i32) {
    %c0_i32 = arith.constant 0 : i32
    %c0_i32_0 = arith.constant 0 : i32
    %c0_i32_1 = arith.constant 0 : i32
    return %c0_i32, %c0_i32_0 : i32, i32
  }
  func.func @transform_3(%arg0: i32) -> (i32, i32) {
    %c0_i32 = arith.constant 0 : i32
    %c0_i32_0 = arith.constant 0 : i32
    %c0_i32_1 = arith.constant 0 : i32
    return %c0_i32, %c0_i32_0 : i32, i32
  }
  func.func @transform_4(%arg0: i32) -> (i32, i32) {
    %c0_i32 = arith.constant 0 : i32
    %c0_i32_0 = arith.constant 0 : i32
    %c0_i32_1 = arith.constant 0 : i32
    return %c0_i32, %c0_i32_0 : i32, i32
  }
  func.func @transform_5(%arg0: i32) -> (i32, i32) {
    %c0_i32 = arith.constant 0 : i32
    %c0_i32_0 = arith.constant 0 : i32
    %c0_i32_1 = arith.constant 0 : i32
    return %c0_i32, %c0_i32_0 : i32, i32
  }
  func.func @transform_6(%arg0: i32) -> (i32, i32) {
    %c0_i32 = arith.constant 0 : i32
    %c0_i32_0 = arith.constant 0 : i32
    %c0_i32_1 = arith.constant 0 : i32
    return %c0_i32, %c0_i32_0 : i32, i32
  }
  func.func @transform_7(%arg0: i32) -> (i32, i32) {
    %c0_i32 = arith.constant 0 : i32
    %c0_i32_0 = arith.constant 0 : i32
    return %arg0, %c0_i32 : i32, i32
  }
}

</mosaic_0001>

<llo_original>
// kernel: very_tiny_nerf_forward.1
$region0: #{very_tiny_nerf_forward.1}
  #allocation0 [shape = 'u32[]', space=smem, size = 0x4, offset = 0x4, fixed_abs, tag = 'smem constant byte address 0x4 - core index']
  #allocation1 [shape = 'u32[144,128]{1,0:T(1,128)}', space=vmem, size = 0x12000, scoped, tag = 'internal scratch']
  %s0 = inlined_call_operand.vmem [shape: f32[1000,78], index: 0, kind: input, shape index: {}]
  %s1 = inlined_call_operand.vmem [shape: bf16[78,128], index: 1, kind: input, shape index: {}]
  %s2 = inlined_call_operand.vmem [shape: f32[1,128], index: 2, kind: input, shape index: {}]
  %s3 = inlined_call_operand.vmem [shape: bf16[128,128], index: 3, kind: input, shape index: {}]
  %s4 = inlined_call_operand.vmem [shape: f32[1,128], index: 4, kind: input, shape index: {}]
  %s5 = inlined_call_operand.vmem [shape: bf16[128,4], index: 5, kind: input, shape index: {}]
  %s6 = inlined_call_operand.vmem [shape: f32[1,4], index: 6, kind: input, shape index: {}]
  %s7 = inlined_call_operand.vmem [shape: f32[1000,4], index: 7, kind: output, shape index: {}]
  %s8 = sld [smem:[#allocation0]]
  $region109: #{very_tiny_nerf_forward.1} parent=0
    _
  %s10 = ssub.s32 1, %s8
  %s11 = scalar_select 0, %s10, %s8
  $region1: #{very_tiny_nerf_forward.1} parent=0
    #allocation2 [shape = 'u8[524288]{0}', space=vmem, size = 0x80000, scoped, tag = 'output window, operand 0']
    loop: start=0, step=1, limit=4
    $region2: #{very_tiny_nerf_forward.1} parent=1 // loop_pre_header
      _
    $region3: #{very_tiny_nerf_forward.1} parent=1 // loop_header
      %s13 = sphi 0, %s17
      %p14 = scmp.ge.s32.totalorder %s13, 4
      %s23 = sphi 0, %s25
      %s26 = sphi 0, %s23
      %s27 = sphi 0, %s26
      %s43 = sphi 0, %s27
      %s47 = sphi 0, %s47
      %s49 = sphi 0, %s47
      %s50 = sphi 0, %s49
      %s64 = sphi 0, %s50
      %s68 = sphi 0, %s68
      %s70 = sphi 0, %s68
      %s71 = sphi 0, %s70
      %s85 = sphi 0, %s71
      %s89 = sphi 0, %s89
      %s91 = sphi 0, %s89
      %s92 = sphi 0, %s91
      %s106 = sphi 0, %s92
      %s110 = sphi 0, %s110
      %s112 = sphi 0, %s110
      %s113 = sphi 0, %s112
      %s127 = sphi 0, %s113
      %s131 = sphi 0, %s131
      %s133 = sphi 0, %s131
      %s134 = sphi 0, %s133
      %s148 = sphi 0, %s134
      %s152 = sphi 0, %s152
      %s154 = sphi 0, %s152
      %s155 = sphi 0, %s154
      %s169 = sphi 0, %s155
      %s175 = sphi 0, %s177
      %s178 = sphi 0, %s175
      %s179 = sphi 0, %s178
      %s195 = sphi 0, %s179
    $region4: #{very_tiny_nerf_forward.1} parent=1 // loop_header_branch
      %16 = sbr.rel (%p14) target = $region8
    $region5: #{very_tiny_nerf_forward.1} parent=1 // loop_body
      %s18 = ssub.s32 %s13, 1
      %s19 = ssub.s32 %s13, 2
      %s20 = sadd.s32 %s13, 1
      %s21 = ssub.s32 %s13, %s20
      %p22 = scmp.eq.s32.totalorder %s21, 0
      %s24 = sadd.s32 %s23, 1
      %s25 = scalar_select %p22, %s23, %s24
      %p28 = pneg %p22
      %p29 = scmp.eq.s32.totalorder %s13, 1
      %p30 = por %p28, %p29
      %p31 = scmp.ne.s32.totalorder %s23, %s26
      %p32 = scmp.eq.s32.totalorder %s13, 0
      %p33 = por %p31, %p32
      %p34 = scmp.ne.s32.totalorder %s23, %s26
      %p35 = scmp.eq.s32.totalorder %s18, 1
      %p36 = por %p34, %p35
      %p37 = scmp.ne.s32.totalorder %s26, %s27
      %p38 = scmp.eq.s32.totalorder %s18, 0
      %p39 = por %p37, %p38
      %p40 = scmp.ne.s32.totalorder %s26, %s27
      %p41 = scmp.eq.s32.totalorder %s19, 1
      %p42 = por %p40, %p41
      %p44 = scmp.ne.s32.totalorder %s27, %s43
      %p45 = scmp.eq.s32.totalorder %s19, 0
      %p46 = por %p44, %p45
      %s48 = sadd.s32 %s47, 1
      %p51 = scmp.eq.s32.totalorder %s13, 1
      %p52 = scmp.ne.s32.totalorder %s47, %s49
      %p53 = scmp.eq.s32.totalorder %s13, 0
      %p54 = por %p52, %p53
      %p55 = scmp.ne.s32.totalorder %s47, %s49
      %p56 = scmp.eq.s32.totalorder %s18, 1
      %p57 = por %p55, %p56
      %p58 = scmp.ne.s32.totalorder %s49, %s50
      %p59 = scmp.eq.s32.totalorder %s18, 0
      %p60 = por %p58, %p59
      %p61 = scmp.ne.s32.totalorder %s49, %s50
      %p62 = scmp.eq.s32.totalorder %s19, 1
      %p63 = por %p61, %p62
      %p65 = scmp.ne.s32.totalorder %s50, %s64
      %p66 = scmp.eq.s32.totalorder %s19, 0
      %p67 = por %p65, %p66
      %s69 = sadd.s32 %s68, 1
      %p72 = scmp.eq.s32.totalorder %s13, 1
      %p73 = scmp.ne.s32.totalorder %s68, %s70
      %p74 = scmp.eq.s32.totalorder %s13, 0
      %p75 = por %p73, %p74
      %p76 = scmp.ne.s32.totalorder %s68, %s70
      %p77 = scmp.eq.s32.totalorder %s18, 1
      %p78 = por %p76, %p77
      %p79 = scmp.ne.s32.totalorder %s70, %s71
      %p80 = scmp.eq.s32.totalorder %s18, 0
      %p81 = por %p79, %p80
      %p82 = scmp.ne.s32.totalorder %s70, %s71
      %p83 = scmp.eq.s32.totalorder %s19, 1
      %p84 = por %p82, %p83
      %p86 = scmp.ne.s32.totalorder %s71, %s85
      %p87 = scmp.eq.s32.totalorder %s19, 0
      %p88 = por %p86, %p87
      %s90 = sadd.s32 %s89, 1
      %p93 = scmp.eq.s32.totalorder %s13, 1
      %p94 = scmp.ne.s32.totalorder %s89, %s91
      %p95 = scmp.eq.s32.totalorder %s13, 0
      %p96 = por %p94, %p95
      %p97 = scmp.ne.s32.totalorder %s89, %s91
      %p98 = scmp.eq.s32.totalorder %s18, 1
      %p99 = por %p97, %p98
      %p100 = scmp.ne.s32.totalorder %s91, %s92
      %p101 = scmp.eq.s32.totalorder %s18, 0
      %p102 = por %p100, %p101
      %p103 = scmp.ne.s32.totalorder %s91, %s92
      %p104 = scmp.eq.s32.totalorder %s19, 1
      %p105 = por %p103, %p104
      %p107 = scmp.ne.s32.totalorder %s92, %s106
      %p108 = scmp.eq.s32.totalorder %s19, 0
      %p109 = por %p107, %p108
      %s111 = sadd.s32 %s110, 1
      %p114 = scmp.eq.s32.totalorder %s13, 1
      %p115 = scmp.ne.s32.totalorder %s110, %s112
      %p116 = scmp.eq.s32.totalorder %s13, 0
      %p117 = por %p115, %p116
      %p118 = scmp.ne.s32.totalorder %s110, %s112
      %p119 = scmp.eq.s32.totalorder %s18, 1
      %p120 = por %p118, %p119
      %p121 = scmp.ne.s32.totalorder %s112, %s113
      %p122 = scmp.eq.s32.totalorder %s18, 0
      %p123 = por %p121, %p122
      %p124 = scmp.ne.s32.totalorder %s112, %s113
      %p125 = scmp.eq.s32.totalorder %s19, 1
      %p126 = por %p124, %p125
      %p128 = scmp.ne.s32.totalorder %s113, %s127
      %p129 = scmp.eq.s32.totalorder %s19, 0
      %p130 = por %p128, %p129
      %s132 = sadd.s32 %s131, 1
      %p135 = scmp.eq.s32.totalorder %s13, 1
      %p136 = scmp.ne.s32.totalorder %s131, %s133
      %p137 = scmp.eq.s32.totalorder %s13, 0
      %p138 = por %p136, %p137
      %p139 = scmp.ne.s32.totalorder %s131, %s133
      %p140 = scmp.eq.s32.totalorder %s18, 1
      %p141 = por %p139, %p140
      %p142 = scmp.ne.s32.totalorder %s133, %s134
      %p143 = scmp.eq.s32.totalorder %s18, 0
      %p144 = por %p142, %p143
      %p145 = scmp.ne.s32.totalorder %s133, %s134
      %p146 = scmp.eq.s32.totalorder %s19, 1
      %p147 = por %p145, %p146
      %p149 = scmp.ne.s32.totalorder %s134, %s148
      %p150 = scmp.eq.s32.totalorder %s19, 0
      %p151 = por %p149, %p150
      %s153 = sadd.s32 %s152, 1
      %p156 = scmp.eq.s32.totalorder %s13, 1
      %p157 = scmp.ne.s32.totalorder %s152, %s154
      %p158 = scmp.eq.s32.totalorder %s13, 0
      %p159 = por %p157, %p158
      %p160 = scmp.ne.s32.totalorder %s152, %s154
      %p161 = scmp.eq.s32.totalorder %s18, 1
      %p162 = por %p160, %p161
      %p163 = scmp.ne.s32.totalorder %s154, %s155
      %p164 = scmp.eq.s32.totalorder %s18, 0
      %p165 = por %p163, %p164
      %p166 = scmp.ne.s32.totalorder %s154, %s155
      %p167 = scmp.eq.s32.totalorder %s19, 1
      %p168 = por %p166, %p167
      %p170 = scmp.ne.s32.totalorder %s155, %s169
      %p171 = scmp.eq.s32.totalorder %s19, 0
      %p172 = por %p170, %p171
      %s173 = ssub.s32 %s13, %s20
      %p174 = scmp.eq.s32.totalorder %s173, 0
      %s176 = sadd.s32 %s175, 1
      %s177 = scalar_select %p174, %s175, %s176
      %p180 = pneg %p174
      %p181 = scmp.eq.s32.totalorder %s13, 1
      %p182 = por %p180, %p181
      %p183 = scmp.ne.s32.totalorder %s175, %s178
      %p184 = scmp.eq.s32.totalorder %s13, 0
      %p185 = por %p183, %p184
      %p186 = scmp.ne.s32.totalorder %s175, %s178
      %p187 = scmp.eq.s32.totalorder %s18, 1
      %p188 = por %p186, %p187
      %p189 = scmp.ne.s32.totalorder %s178, %s179
      %p190 = scmp.eq.s32.totalorder %s18, 0
      %p191 = por %p189, %p190
      %p192 = scmp.ne.s32.totalorder %s178, %s179
      %p193 = scmp.eq.s32.totalorder %s19, 1
      %p194 = por %p192, %p193
      %p196 = scmp.ne.s32.totalorder %s179, %s195
      %p197 = scmp.eq.s32.totalorder %s19, 0
      %p198 = por %p196, %p197
      %p199 = scmp.le.s32.totalorder 1, %s13
      %p200 = scmp.lt.s32.totalorder %s13, 3
      %p201 = pnand %p199, %p200
      %p202 = pneg %p201
      // Predicated region
      $region9: #{very_tiny_nerf_forward.1} parent=5 // pred_check
        _
      $region10: #{very_tiny_nerf_forward.1} parent=5 // pred_check_branch
        %204 = sbr.rel (%p201) target = $region12
      $region11: #{very_tiny_nerf_forward.1} parent=5 // pred_region
        %s205 = ssub.s32 %s13, 1
        // Predicated region
        $region13: #{very_tiny_nerf_forward.1} parent=11 // pred_check
          %p206 = pneg %p60
        $region14: #{very_tiny_nerf_forward.1} parent=11 // pred_check_branch
          %208 = sbr.rel (%p206) target = $region16
        $region15: #{very_tiny_nerf_forward.1} parent=11 // pred_region
          _
        $region16: #{very_tiny_nerf_forward.1} parent=11 // pred_fallthru
          _
        // Predicated region
        $region17: #{very_tiny_nerf_forward.1} parent=11 // pred_check
          %p209 = pneg %p81
        $region18: #{very_tiny_nerf_forward.1} parent=11 // pred_check_branch
          %211 = sbr.rel (%p209) target = $region20
        $region19: #{very_tiny_nerf_forward.1} parent=11 // pred_region
          _
        $region20: #{very_tiny_nerf_forward.1} parent=11 // pred_fallthru
          _
        // Predicated region
        $region21: #{very_tiny_nerf_forward.1} parent=11 // pred_check
          %p212 = pneg %p102
        $region22: #{very_tiny_nerf_forward.1} parent=11 // pred_check_branch
          %214 = sbr.rel (%p212) target = $region24
        $region23: #{very_tiny_nerf_forward.1} parent=11 // pred_region
          _
        $region24: #{very_tiny_nerf_forward.1} parent=11 // pred_fallthru
          _
        // Predicated region
        $region25: #{very_tiny_nerf_forward.1} parent=11 // pred_check
          %p215 = pneg %p123
        $region26: #{very_tiny_nerf_forward.1} parent=11 // pred_check_branch
          %217 = sbr.rel (%p215) target = $region28
        $region27: #{very_tiny_nerf_forward.1} parent=11 // pred_region
          _
        $region28: #{very_tiny_nerf_forward.1} parent=11 // pred_fallthru
          _
        // Predicated region
        $region29: #{very_tiny_nerf_forward.1} parent=11 // pred_check
          %p218 = pneg %p144
        $region30: #{very_tiny_nerf_forward.1} parent=11 // pred_check_branch
          %220 = sbr.rel (%p218) target = $region32
        $region31: #{very_tiny_nerf_forward.1} parent=11 // pred_region
          _
        $region32: #{very_tiny_nerf_forward.1} parent=11 // pred_fallthru
          _
        // Predicated region
        $region33: #{very_tiny_nerf_forward.1} parent=11 // pred_check
          %p221 = pneg %p165
        $region34: #{very_tiny_nerf_forward.1} parent=11 // pred_check_branch
          %223 = sbr.rel (%p221) target = $region36
        $region35: #{very_tiny_nerf_forward.1} parent=11 // pred_region
          _
        $region36: #{very_tiny_nerf_forward.1} parent=11 // pred_fallthru
          _
      $region12: #{very_tiny_nerf_forward.1} parent=5 // pred_fallthru
        _
      %p224 = scmp.lt.s32.totalorder %s13, 2
      // Predicated region
      $region37: #{very_tiny_nerf_forward.1} parent=5 // pred_check
        %p225 = pneg %p224
      $region38: #{very_tiny_nerf_forward.1} parent=5 // pred_check_branch
        %227 = sbr.rel (%p225) target = $region40
      $region39: #{very_tiny_nerf_forward.1} parent=5 // pred_region
        // Predicated region
        $region41: #{very_tiny_nerf_forward.1} parent=39 // pred_check
          %p228 = pneg %p33
        $region42: #{very_tiny_nerf_forward.1} parent=39 // pred_check_branch
          %230 = sbr.rel (%p228) target = $region44
        $region43: #{very_tiny_nerf_forward.1} parent=39 // pred_region
          %s231 = smul.u32 64, %s13
          %s232 = ssub.s32 125, %s231
          %p233 = scmp.lt.s32.totalorder %s232, 64
          %s234 = scalar_select %p233, %s232, 64
          %s235 = smul.u32 128, %s234
          %p236 = scmp.lt.s32.totalorder %s231, 124
          %s237 = scalar_select %p236, %s231, 124
          %s238 = smul.addr %s237, 8
          %s239 = scalar_lea.vmem %s0, %s238
          %s240 = smul.u32 64, %s13
          %s241 = ssub.s32 125, %s240
          %p242 = scmp.lt.s32.totalorder %s241, 64
          %s243 = scalar_select %p242, %s241, 64
          %s244 = smul.u32 128, %s243
        $region44: #{very_tiny_nerf_forward.1} parent=39 // pred_fallthru
          _
      $region40: #{very_tiny_nerf_forward.1} parent=5 // pred_fallthru
        _
      %p245 = scmp.le.s32.totalorder 1, %s13
      %p246 = scmp.lt.s32.totalorder %s13, 3
      %p247 = pnand %p245, %p246
      %p248 = pneg %p247
      // Predicated region
      $region45: #{very_tiny_nerf_forward.1} parent=5 // pred_check
        _
      $region46: #{very_tiny_nerf_forward.1} parent=5 // pred_check_branch
        %250 = sbr.rel (%p247) target = $region48
      $region47: #{very_tiny_nerf_forward.1} parent=5 // pred_region
        %s251 = ssub.s32 %s13, 1
        %s252 = smul.u32 64, %s18
        %s253 = ssub.s32 125, %s252
        %p254 = scmp.lt.s32.totalorder %s253, 64
        %s255 = scalar_select %p254, %s253, 64
        %s256 = smul.u32 128, %s255
        %p257 = scmp.lt.s32.totalorder %s252, 124
        %s258 = scalar_select %p257, %s252, 124
        %s259 = smul.addr %s258, 8
        %s260 = scalar_lea.vmem %s0, %s259
        %p261 = pneg %p39
        %p262 = pneg %p36
        %p263 = pneg %p60
        %p264 = pneg %p57
        %p265 = pneg %p81
        %p266 = pneg %p78
        %p267 = pneg %p102
        %p268 = pneg %p99
        %p269 = pneg %p123
        %p270 = pneg %p120
        %p271 = pneg %p144
        %p272 = pneg %p141
        %p273 = pneg %p165
        %p274 = pneg %p162
        %p275 = pneg %p191
        %p276 = pneg %p188
        %s277 = sand.u32 %s178, 1
        %s278 = sand.u32 %s178, 1
        %s279 = smul.addr %s278, 512
        %s280 = scalar_lea.vmem [#allocation2], %s279
        %s281 = smul.u32 64, %s18
        %s282 = ssub.s32 125, %s281
        %p283 = scmp.lt.s32.totalorder %s282, 64
        %s284 = scalar_select %p283, %s282, 64
        %s285 = smul.u32 128, %s284
        %p286 = scmp.lt.s32.totalorder %s281, 124
        %s287 = scalar_select %p286, %s281, 124
        %s288 = smul.addr %s287, 8
        %s289 = scalar_lea.vmem %s0, %s288
        %s290 = smul.u32 64, %s18
        %s291 = ssub.s32 125, %s290
        %p292 = scmp.lt.s32.totalorder %s291, 64
        %s293 = scalar_select %p292, %s291, 64
        %s294 = smul.u32 128, %s293
        %s295 = smul.u32 64, %s18
        %s296 = ssub.s32 125, %s295
        %p297 = scmp.lt.s32.totalorder %s296, 64
        %s298 = scalar_select %p297, %s296, 64
        %s299 = smul.u32 128, %s298
        %v301 = vld [vmem:[%s289] sm:$0xff]
        %v302 = vld [vmem:[%s289 + $0x8] sm:$0xff]
        %v303 = vld [vmem:[%s289 + $0x10] sm:$0xff]
        %v304 = vld [vmem:[%s289 + $0x18] sm:$0xff]
        %v305 = vld [vmem:[%s289 + $0x20] sm:$0xff]
        %v306 = vld [vmem:[%s289 + $0x28] sm:$0xff]
        %v307 = vld [vmem:[%s289 + $0x30] sm:$0xff]
        %v308 = vld [vmem:[%s289 + $0x38] sm:$0xff]
        %v309 = vld [vmem:[%s289 + $0x40] sm:$0xff]
        %v310 = vld [vmem:[%s289 + $0x48] sm:$0xff]
        %v311 = vld [vmem:[%s289 + $0x50] sm:$0xff]
        %v312 = vld [vmem:[%s289 + $0x58] sm:$0xff]
        %v313 = vld [vmem:[%s289 + $0x60] sm:$0xff]
        %v314 = vld [vmem:[%s289 + $0x68] sm:$0xff]
        %v315 = vld [vmem:[%s289 + $0x70] sm:$0xff]
        %v316 = vld [vmem:[%s289 + $0x78] sm:$0xff]
        %v317 = vld [vmem:[%s289 + $0x80] sm:$0xff]
        %v318 = vld [vmem:[%s289 + $0x88] sm:$0xff]
        %v319 = vld [vmem:[%s289 + $0x90] sm:$0xff]
        %v320 = vld [vmem:[%s289 + $0x98] sm:$0xff]
        %v321 = vld [vmem:[%s289 + $0xa0] sm:$0xff]
        %v322 = vld [vmem:[%s289 + $0xa8] sm:$0xff]
        %v323 = vld [vmem:[%s289 + $0xb0] sm:$0xff]
        %v324 = vld [vmem:[%s289 + $0xb8] sm:$0xff]
        %v325 = vld [vmem:[%s289 + $0xc0] sm:$0xff]
        %v326 = vld [vmem:[%s289 + $0xc8] sm:$0xff]
        %v327 = vld [vmem:[%s289 + $0xd0] sm:$0xff]
        %v328 = vld [vmem:[%s289 + $0xd8] sm:$0xff]
        %v329 = vld [vmem:[%s289 + $0xe0] sm:$0xff]
        %v330 = vld [vmem:[%s289 + $0xe8] sm:$0xff]
        %v331 = vld [vmem:[%s289 + $0xf0] sm:$0xff]
        %v332 = vld [vmem:[%s289 + $0xf8] sm:$0xff]
        %v333 = vld [vmem:[%s289 + $0x100] sm:$0xff]
        %v334 = vld [vmem:[%s289 + $0x108] sm:$0xff]
        %v335 = vld [vmem:[%s289 + $0x110] sm:$0xff]
        %v336 = vld [vmem:[%s289 + $0x118] sm:$0xff]
        %v337 = vld [vmem:[%s289 + $0x120] sm:$0xff]
        %v338 = vld [vmem:[%s289 + $0x128] sm:$0xff]
        %v339 = vld [vmem:[%s289 + $0x130] sm:$0xff]
        %v340 = vld [vmem:[%s289 + $0x138] sm:$0xff]
        %v341 = vld [vmem:[%s289 + $0x140] sm:$0xff]
        %v342 = vld [vmem:[%s289 + $0x148] sm:$0xff]
        %v343 = vld [vmem:[%s289 + $0x150] sm:$0xff]
        %v344 = vld [vmem:[%s289 + $0x158] sm:$0xff]
        %v345 = vld [vmem:[%s289 + $0x160] sm:$0xff]
        %v346 = vld [vmem:[%s289 + $0x168] sm:$0xff]
        %v347 = vld [vmem:[%s289 + $0x170] sm:$0xff]
        %v348 = vld [vmem:[%s289 + $0x178] sm:$0xff]
        %v349 = vld [vmem:[%s289 + $0x180] sm:$0xff]
        %v350 = vld [vmem:[%s289 + $0x188] sm:$0xff]
        %v351 = vld [vmem:[%s289 + $0x190] sm:$0xff]
        %v352 = vld [vmem:[%s289 + $0x198] sm:$0xff]
        %v353 = vld [vmem:[%s289 + $0x1a0] sm:$0xff]
        %v354 = vld [vmem:[%s289 + $0x1a8] sm:$0xff]
        %v355 = vld [vmem:[%s289 + $0x1b0] sm:$0xff]
        %v356 = vld [vmem:[%s289 + $0x1b8] sm:$0xff]
        %v357 = vld [vmem:[%s289 + $0x1c0] sm:$0xff]
        %v358 = vld [vmem:[%s289 + $0x1c8] sm:$0xff]
        %v359 = vld [vmem:[%s289 + $0x1d0] sm:$0xff]
        %v360 = vld [vmem:[%s289 + $0x1d8] sm:$0xff]
        %v361 = vld [vmem:[%s289 + $0x1e0] sm:$0xff]
        %v362 = vld [vmem:[%s289 + $0x1e8] sm:$0xff]
        %v363 = vld [vmem:[%s289 + $0x1f0] sm:$0xff]
        %v364 = vld [vmem:[%s289 + $0x1f8] sm:$0xff]
        %v365 = vpack.c.bf16 %v302, %v301
        %v366 = vpack.c.bf16 %v304, %v303
        %v367 = vpack.c.bf16 %v306, %v305
        %v368 = vpack.c.bf16 %v308, %v307
        %v369 = vpack.c.bf16 %v310, %v309
        %v370 = vpack.c.bf16 %v312, %v311
        %v371 = vpack.c.bf16 %v314, %v313
        %v372 = vpack.c.bf16 %v316, %v315
        %v373 = vpack.c.bf16 %v318, %v317
        %v374 = vpack.c.bf16 %v320, %v319
        %v375 = vpack.c.bf16 %v322, %v321
        %v376 = vpack.c.bf16 %v324, %v323
        %v377 = vpack.c.bf16 %v326, %v325
        %v378 = vpack.c.bf16 %v328, %v327
        %v379 = vpack.c.bf16 %v330, %v329
        %v380 = vpack.c.bf16 %v332, %v331
        %v381 = vpack.c.bf16 %v334, %v333
        %v382 = vpack.c.bf16 %v336, %v335
        %v383 = vpack.c.bf16 %v338, %v337
        %v384 = vpack.c.bf16 %v340, %v339
        %v385 = vpack.c.bf16 %v342, %v341
        %v386 = vpack.c.bf16 %v344, %v343
        %v387 = vpack.c.bf16 %v346, %v345
        %v388 = vpack.c.bf16 %v348, %v347
        %v389 = vpack.c.bf16 %v350, %v349
        %v390 = vpack.c.bf16 %v352, %v351
        %v391 = vpack.c.bf16 %v354, %v353
        %v392 = vpack.c.bf16 %v356, %v355
        %v393 = vpack.c.bf16 %v358, %v357
        %v394 = vpack.c.bf16 %v360, %v359
        %v395 = vpack.c.bf16 %v362, %v361
        %v396 = vpack.c.bf16 %v364, %v363
        %v397 = vld [vmem:[%s1] sm:$0xf]
        %v398 = vld [vmem:[%s1 + $0x4] sm:$0xf]
        %v399 = vld [vmem:[%s1 + $0x8] sm:$0xf]
        %v400 = vld [vmem:[%s1 + $0xc] sm:$0xf]
        %v401 = vld [vmem:[%s1 + $0x10] sm:$0xf]
        %v402 = vld [vmem:[%s1 + $0x14] sm:$0xf]
        %v403 = vld [vmem:[%s1 + $0x18] sm:$0xf]
        %v404 = vld [vmem:[%s1 + $0x1c] sm:$0xf]
        %v405 = vld [vmem:[%s1 + $0x20] sm:$0xf]
        %v406 = vld [vmem:[%s1 + $0x24] sm:$0x7]
        %v407 = vld [vmem:[%s2] sm:$0x1]
        %v409 = vlaneseq
        %v410 = vshrl.u32 %v409, 7
        %v411 = vsub.s32 0, %v410
        %v412 = vrot.slane %v407, %v411
        %v424 = vunpack.c.l.b16 %v397
        %v425 = vunpack.c.l.b16 %v398
        %v426 = vunpack.c.l.b16 %v399
        %v427 = vunpack.c.l.b16 %v400
        %v428 = vunpack.c.l.b16 %v401
        %v429 = vunpack.c.l.b16 %v402
        %v430 = vunpack.c.l.b16 %v403
        %v431 = vunpack.c.l.b16 %v404
        %v432 = vunpack.c.l.b16 %v405
        %v433 = vunpack.c.l.b16 %v406
        %v434 = vpack.c.b16 %v425, %v424
        %v435 = vpack.c.b16 %v427, %v426
        %v436 = vpack.c.b16 %v429, %v428
        %v437 = vpack.c.b16 %v431, %v430
        %v438 = vpack.c.b16 %v433, %v432
        %vm443 = vcmask 637952
        %v445 = vsel %vm443, %v365, 0
        %v448 = vsel %vm443, %v366, 0
        %v451 = vsel %vm443, %v367, 0
        %v454 = vsel %vm443, %v368, 0
        %v457 = vsel %vm443, %v369, 0
        %v460 = vsel %vm443, %v370, 0
        %v463 = vsel %vm443, %v371, 0
        %v466 = vsel %vm443, %v372, 0
        %v469 = vsel %vm443, %v373, 0
        %v472 = vsel %vm443, %v374, 0
        %v475 = vsel %vm443, %v375, 0
        %v478 = vsel %vm443, %v376, 0
        %v481 = vsel %vm443, %v377, 0
        %v484 = vsel %vm443, %v378, 0
        %v487 = vsel %vm443, %v379, 0
        %v490 = vsel %vm443, %v380, 0
        %v493 = vsel %vm443, %v381, 0
        %v496 = vsel %vm443, %v382, 0
        %v499 = vsel %vm443, %v383, 0
        %v502 = vsel %vm443, %v384, 0
        %v505 = vsel %vm443, %v385, 0
        %v508 = vsel %vm443, %v386, 0
        %v511 = vsel %vm443, %v387, 0
        %v514 = vsel %vm443, %v388, 0
        %v517 = vsel %vm443, %v389, 0
        %v520 = vsel %vm443, %v390, 0
        %v523 = vsel %vm443, %v391, 0
        %v526 = vsel %vm443, %v392, 0
        %v529 = vsel %vm443, %v393, 0
        %v532 = vsel %vm443, %v394, 0
        %v535 = vsel %vm443, %v395, 0
        %v538 = vsel %vm443, %v396, 0
        %vm540 = vcmask 1046528
        %v542 = vsel %vm540, %v438, 0
        %544 = vmatprep.subr.bf16.mxu0 0
        %545 = vmatpush1.bf16.msra.mxu0 %v434
        %546 = vmatprep.subr.bf16.mxu0 0
        %547 = vmatpush1.bf16.msra.mxu0 %v435
        %548 = vmatprep.subr.bf16.mxu0 0
        %549 = vmatpush1.bf16.msra.mxu0 %v436
        %550 = vmatprep.subr.bf16.mxu0 0
        %551 = vmatpush1.bf16.msra.mxu0 %v437
        %552 = vmatprep.subr.bf16.mxu0 0
        %553 = vmatpush1.bf16.msra.mxu0 %v542
        %554 = vmatprep.subr.bf16.mxu0 0
        %555 = vmatpush1.bf16.msra.mxu0 0
        %556 = vmatprep.subr.bf16.mxu0 0
        %557 = vmatpush1.bf16.msra.mxu0 0
        %558 = vmatprep.subr.bf16.mxu0 0
        %559 = vmatpush1.bf16.msra.mxu0 0
        %560 = vmatprep.subr.bf16.mxu0 0
        %561 = vmatpush1.bf16.msra.mxu0 0
        %562 = vmatprep.subr.bf16.mxu0 0
        %563 = vmatpush1.bf16.msra.mxu0 0
        %564 = vmatprep.subr.bf16.mxu0 0
        %565 = vmatpush1.bf16.msra.mxu0 0
        %566 = vmatprep.subr.bf16.mxu0 0
        %567 = vmatpush1.bf16.msra.mxu0 0
        %568 = vmatprep.subr.bf16.mxu0 0
        %569 = vmatpush1.bf16.msra.mxu0 0
        %570 = vmatprep.subr.bf16.mxu0 0
        %571 = vmatpush1.bf16.msra.mxu0 0
        %572 = vmatprep.subr.bf16.mxu0 0
        %573 = vmatpush1.bf16.msra.mxu0 0
        %574 = vmatprep.subr.bf16.mxu0 0
        %575 = vmatpush1.bf16.msra.mxu0 0
        %576 = vmatprep.mubr.bf16.mxu0 0
        %577 = vmatmul.mubr.bf16.gmra.mrb[0].mxu0 %v445
        %v578 = vpop.f32.mrb[0].mxu0
        %v579 = vadd.f32 %v412, %v578
        %v580 = vpop.f32.mrb[0].mxu0
        %v581 = vpop.f32.mrb[0].mxu0
        %v582 = vadd.f32 %v412, %v581
        %v583 = vpop.f32.mrb[0].mxu0
        %584 = vmatprep.mubr.bf16.mxu0 0
        %585 = vmatmul.mubr.bf16.gmra.mrb[0].mxu0 %v448
        %v586 = vpop.f32.mrb[0].mxu0
        %v587 = vadd.f32 %v412, %v586
        %v588 = vpop.f32.mrb[0].mxu0
        %v589 = vpop.f32.mrb[0].mxu0
        %v590 = vadd.f32 %v412, %v589
        %v591 = vpop.f32.mrb[0].mxu0
        %592 = vmatprep.mubr.bf16.mxu0 0
        %593 = vmatmul.mubr.bf16.gmra.mrb[0].mxu0 %v451
        %v594 = vpop.f32.mrb[0].mxu0
        %v595 = vadd.f32 %v412, %v594
        %v596 = vpop.f32.mrb[0].mxu0
        %v597 = vpop.f32.mrb[0].mxu0
        %v598 = vadd.f32 %v412, %v597
        %v599 = vpop.f32.mrb[0].mxu0
        %600 = vmatprep.mubr.bf16.mxu0 0
        %601 = vmatmul.mubr.bf16.gmra.mrb[0].mxu0 %v454
        %v602 = vpop.f32.mrb[0].mxu0
        %v603 = vadd.f32 %v412, %v602
        %v604 = vpop.f32.mrb[0].mxu0
        %v605 = vpop.f32.mrb[0].mxu0
        %v606 = vadd.f32 %v412, %v605
        %v607 = vpop.f32.mrb[0].mxu0
        %608 = vmatprep.mubr.bf16.mxu0 0
        %609 = vmatmul.mubr.bf16.gmra.mrb[0].mxu0 %v457
        %v610 = vpop.f32.mrb[0].mxu0
        %v611 = vadd.f32 %v412, %v610
        %v612 = vpop.f32.mrb[0].mxu0
        %v613 = vpop.f32.mrb[0].mxu0
        %v614 = vadd.f32 %v412, %v613
        %v615 = vpop.f32.mrb[0].mxu0
        %616 = vmatprep.mubr.bf16.mxu0 0
        %617 = vmatmul.mubr.bf16.gmra.mrb[0].mxu0 %v460
        %v618 = vpop.f32.mrb[0].mxu0
        %v619 = vadd.f32 %v412, %v618
        %v620 = vpop.f32.mrb[0].mxu0
        %v621 = vpop.f32.mrb[0].mxu0
        %v622 = vadd.f32 %v412, %v621
        %v623 = vpop.f32.mrb[0].mxu0
        %624 = vmatprep.mubr.bf16.mxu0 0
        %625 = vmatmul.mubr.bf16.gmra.mrb[0].mxu0 %v463
        %v626 = vpop.f32.mrb[0].mxu0
        %v627 = vadd.f32 %v412, %v626
        %v628 = vpop.f32.mrb[0].mxu0
        %v629 = vpop.f32.mrb[0].mxu0
        %v630 = vadd.f32 %v412, %v629
        %v631 = vpop.f32.mrb[0].mxu0
        %632 = vmatprep.mubr.bf16.mxu0 0
        %633 = vmatmul.mubr.bf16.gmra.mrb[0].mxu0 %v466
        %v634 = vpop.f32.mrb[0].mxu0
        %v635 = vadd.f32 %v412, %v634
        %v636 = vpop.f32.mrb[0].mxu0
        %v637 = vpop.f32.mrb[0].mxu0
        %v638 = vadd.f32 %v412, %v637
        %v639 = vpop.f32.mrb[0].mxu0
        %640 = vmatprep.mubr.bf16.mxu0 0
        %641 = vmatmul.mubr.bf16.gmra.mrb[0].mxu0 %v469
        %v642 = vpop.f32.mrb[0].mxu0
        %v643 = vadd.f32 %v412, %v642
        %v644 = vpop.f32.mrb[0].mxu0
        %v645 = vpop.f32.mrb[0].mxu0
        %v646 = vadd.f32 %v412, %v645
        %v647 = vpop.f32.mrb[0].mxu0
        %648 = vmatprep.mubr.bf16.mxu0 0
        %649 = vmatmul.mubr.bf16.gmra.mrb[0].mxu0 %v472
        %v650 = vpop.f32.mrb[0].mxu0
        %v651 = vadd.f32 %v412, %v650
        %v652 = vpop.f32.mrb[0].mxu0
        %v653 = vpop.f32.mrb[0].mxu0
        %v654 = vadd.f32 %v412, %v653
        %v655 = vpop.f32.mrb[0].mxu0
        %656 = vmatprep.mubr.bf16.mxu0 0
        %657 = vmatmul.mubr.bf16.gmra.mrb[0].mxu0 %v475
        %v658 = vpop.f32.mrb[0].mxu0
        %v659 = vadd.f32 %v412, %v658
        %v660 = vpop.f32.mrb[0].mxu0
        %v661 = vpop.f32.mrb[0].mxu0
        %v662 = vadd.f32 %v412, %v661
        %v663 = vpop.f32.mrb[0].mxu0
        %664 = vmatprep.mubr.bf16.mxu0 0
        %665 = vmatmul.mubr.bf16.gmra.mrb[0].mxu0 %v478
        %v666 = vpop.f32.mrb[0].mxu0
        %v667 = vadd.f32 %v412, %v666
        %v668 = vpop.f32.mrb[0].mxu0
        %v669 = vpop.f32.mrb[0].mxu0
        %v670 = vadd.f32 %v412, %v669
        %v671 = vpop.f32.mrb[0].mxu0
        %672 = vmatprep.mubr.bf16.mxu0 0
        %673 = vmatmul.mubr.bf16.gmra.mrb[0].mxu0 %v481
        %v674 = vpop.f32.mrb[0].mxu0
        %v675 = vadd.f32 %v412, %v674
        %v676 = vpop.f32.mrb[0].mxu0
        %v677 = vpop.f32.mrb[0].mxu0
        %v678 = vadd.f32 %v412, %v677
        %v679 = vpop.f32.mrb[0].mxu0
        %680 = vmatprep.mubr.bf16.mxu0 0
        %681 = vmatmul.mubr.bf16.gmra.mrb[0].mxu0 %v484
        %v682 = vpop.f32.mrb[0].mxu0
        %v683 = vadd.f32 %v412, %v682
        %v684 = vpop.f32.mrb[0].mxu0
        %v685 = vpop.f32.mrb[0].mxu0
        %v686 = vadd.f32 %v412, %v685
        %v687 = vpop.f32.mrb[0].mxu0
        %688 = vmatprep.mubr.bf16.mxu0 0
        %689 = vmatmul.mubr.bf16.gmra.mrb[0].mxu0 %v487
        %v690 = vpop.f32.mrb[0].mxu0
        %v691 = vadd.f32 %v412, %v690
        %v692 = vpop.f32.mrb[0].mxu0
        %v693 = vpop.f32.mrb[0].mxu0
        %v694 = vadd.f32 %v412, %v693
        %v695 = vpop.f32.mrb[0].mxu0
        %696 = vmatprep.mubr.bf16.mxu0 0
        %697 = vmatmul.mubr.bf16.gmra.mrb[0].mxu0 %v490
        %v698 = vpop.f32.mrb[0].mxu0
        %v699 = vadd.f32 %v412, %v698
        %v700 = vpop.f32.mrb[0].mxu0
        %v701 = vpop.f32.mrb[0].mxu0
        %v702 = vadd.f32 %v412, %v701
        %v703 = vpop.f32.mrb[0].mxu0
        %704 = vmatprep.mubr.bf16.mxu0 0
        %705 = vmatmul.mubr.bf16.gmra.mrb[0].mxu0 %v493
        %v706 = vpop.f32.mrb[0].mxu0
        %v707 = vadd.f32 %v412, %v706
        %v708 = vpop.f32.mrb[0].mxu0
        %v709 = vpop.f32.mrb[0].mxu0
        %v710 = vadd.f32 %v412, %v709
        %v711 = vpop.f32.mrb[0].mxu0
        %712 = vmatprep.mubr.bf16.mxu0 0
        %713 = vmatmul.mubr.bf16.gmra.mrb[0].mxu0 %v496
        %v714 = vpop.f32.mrb[0].mxu0
        %v715 = vadd.f32 %v412, %v714
        %v716 = vpop.f32.mrb[0].mxu0
        %v717 = vpop.f32.mrb[0].mxu0
        %v718 = vadd.f32 %v412, %v717
        %v719 = vpop.f32.mrb[0].mxu0
        %720 = vmatprep.mubr.bf16.mxu0 0
        %721 = vmatmul.mubr.bf16.gmra.mrb[0].mxu0 %v499
        %v722 = vpop.f32.mrb[0].mxu0
        %v723 = vadd.f32 %v412, %v722
        %v724 = vpop.f32.mrb[0].mxu0
        %v725 = vpop.f32.mrb[0].mxu0
        %v726 = vadd.f32 %v412, %v725
        %v727 = vpop.f32.mrb[0].mxu0
        %728 = vmatprep.mubr.bf16.mxu0 0
        %729 = vmatmul.mubr.bf16.gmra.mrb[0].mxu0 %v502
        %v730 = vpop.f32.mrb[0].mxu0
        %v731 = vadd.f32 %v412, %v730
        %v732 = vpop.f32.mrb[0].mxu0
        %v733 = vpop.f32.mrb[0].mxu0
        %v734 = vadd.f32 %v412, %v733
        %v735 = vpop.f32.mrb[0].mxu0
        %736 = vmatprep.mubr.bf16.mxu0 0
        %737 = vmatmul.mubr.bf16.gmra.mrb[0].mxu0 %v505
        %v738 = vpop.f32.mrb[0].mxu0
        %v739 = vadd.f32 %v412, %v738
        %v740 = vpop.f32.mrb[0].mxu0
        %v741 = vpop.f32.mrb[0].mxu0
        %v742 = vadd.f32 %v412, %v741
        %v743 = vpop.f32.mrb[0].mxu0
        %744 = vmatprep.mubr.bf16.mxu0 0
        %745 = vmatmul.mubr.bf16.gmra.mrb[0].mxu0 %v508
        %v746 = vpop.f32.mrb[0].mxu0
        %v747 = vadd.f32 %v412, %v746
        %v748 = vpop.f32.mrb[0].mxu0
        %v749 = vpop.f32.mrb[0].mxu0
        %v750 = vadd.f32 %v412, %v749
        %v751 = vpop.f32.mrb[0].mxu0
        %752 = vmatprep.mubr.bf16.mxu0 0
        %753 = vmatmul.mubr.bf16.gmra.mrb[0].mxu0 %v511
        %v754 = vpop.f32.mrb[0].mxu0
        %v755 = vadd.f32 %v412, %v754
        %v756 = vpop.f32.mrb[0].mxu0
        %v757 = vpop.f32.mrb[0].mxu0
        %v758 = vadd.f32 %v412, %v757
        %v759 = vpop.f32.mrb[0].mxu0
        %760 = vmatprep.mubr.bf16.mxu0 0
        %761 = vmatmul.mubr.bf16.gmra.mrb[0].mxu0 %v514
        %v762 = vpop.f32.mrb[0].mxu0
        %v763 = vadd.f32 %v412, %v762
        %v764 = vpop.f32.mrb[0].mxu0
        %v765 = vpop.f32.mrb[0].mxu0
        %v766 = vadd.f32 %v412, %v765
        %v767 = vpop.f32.mrb[0].mxu0
        %768 = vmatprep.mubr.bf16.mxu0 0
        %769 = vmatmul.mubr.bf16.gmra.mrb[0].mxu0 %v517
        %v770 = vpop.f32.mrb[0].mxu0
        %v771 = vadd.f32 %v412, %v770
        %v772 = vpop.f32.mrb[0].mxu0
        %v773 = vpop.f32.mrb[0].mxu0
        %v774 = vadd.f32 %v412, %v773
        %v775 = vpop.f32.mrb[0].mxu0
        %776 = vmatprep.mubr.bf16.mxu0 0
        %777 = vmatmul.mubr.bf16.gmra.mrb[0].mxu0 %v520
        %v778 = vpop.f32.mrb[0].mxu0
        %v779 = vadd.f32 %v412, %v778
        %v780 = vpop.f32.mrb[0].mxu0
        %v781 = vpop.f32.mrb[0].mxu0
        %v782 = vadd.f32 %v412, %v781
        %v783 = vpop.f32.mrb[0].mxu0
        %784 = vmatprep.mubr.bf16.mxu0 0
        %785 = vmatmul.mubr.bf16.gmra.mrb[0].mxu0 %v523
        %v786 = vpop.f32.mrb[0].mxu0
        %v787 = vadd.f32 %v412, %v786
        %v788 = vpop.f32.mrb[0].mxu0
        %v789 = vpop.f32.mrb[0].mxu0
        %v790 = vadd.f32 %v412, %v789
        %v791 = vpop.f32.mrb[0].mxu0
        %792 = vmatprep.mubr.bf16.mxu0 0
        %793 = vmatmul.mubr.bf16.gmra.mrb[0].mxu0 %v526
        %v794 = vpop.f32.mrb[0].mxu0
        %v795 = vadd.f32 %v412, %v794
        %v796 = vpop.f32.mrb[0].mxu0
        %v797 = vpop.f32.mrb[0].mxu0
        %v798 = vadd.f32 %v412, %v797
        %v799 = vpop.f32.mrb[0].mxu0
        %800 = vmatprep.mubr.bf16.mxu0 0
        %801 = vmatmul.mubr.bf16.gmra.mrb[0].mxu0 %v529
        %v802 = vpop.f32.mrb[0].mxu0
        %v803 = vadd.f32 %v412, %v802
        %v804 = vpop.f32.mrb[0].mxu0
        %v805 = vpop.f32.mrb[0].mxu0
        %v806 = vadd.f32 %v412, %v805
        %v807 = vpop.f32.mrb[0].mxu0
        %808 = vmatprep.mubr.bf16.mxu0 0
        %809 = vmatmul.mubr.bf16.gmra.mrb[0].mxu0 %v532
        %v810 = vpop.f32.mrb[0].mxu0
        %v811 = vadd.f32 %v412, %v810
        %v812 = vpop.f32.mrb[0].mxu0
        %v813 = vpop.f32.mrb[0].mxu0
        %v814 = vadd.f32 %v412, %v813
        %v815 = vpop.f32.mrb[0].mxu0
        %816 = vmatprep.mubr.bf16.mxu0 0
        %817 = vmatmul.mubr.bf16.gmra.mrb[0].mxu0 %v535
        %v818 = vpop.f32.mrb[0].mxu0
        %v819 = vadd.f32 %v412, %v818
        %v820 = vpop.f32.mrb[0].mxu0
        %v821 = vpop.f32.mrb[0].mxu0
        %v822 = vadd.f32 %v412, %v821
        %v823 = vpop.f32.mrb[0].mxu0
        %824 = vmatprep.mubr.bf16.mxu0 0
        %825 = vmatmul.mubr.bf16.gmra.mrb[0].mxu0 %v538
        %v826 = vpop.f32.mrb[0].mxu0
        %v827 = vadd.f32 %v412, %v826
        %v828 = vpop.f32.mrb[0].mxu0
        %v829 = vpop.f32.mrb[0].mxu0
        %v830 = vadd.f32 %v412, %v829
        %v831 = vpop.f32.mrb[0].mxu0
        %832 = vdwg.mxu0
        %v833 = vmax.f32 %v579, 0.0
        %v834 = vmax.f32 %v582, 0.0
        %v835 = vmax.f32 %v587, 0.0
        %v836 = vmax.f32 %v590, 0.0
        %v837 = vmax.f32 %v595, 0.0
        %v838 = vmax.f32 %v598, 0.0
        %v839 = vmax.f32 %v603, 0.0
        %v840 = vmax.f32 %v606, 0.0
        %v841 = vmax.f32 %v611, 0.0
        %v842 = vmax.f32 %v614, 0.0
        %v843 = vmax.f32 %v619, 0.0
        %v844 = vmax.f32 %v622, 0.0
        %v845 = vmax.f32 %v627, 0.0
        %v846 = vmax.f32 %v630, 0.0
        %v847 = vmax.f32 %v635, 0.0
        %v848 = vmax.f32 %v638, 0.0
        %v849 = vmax.f32 %v643, 0.0
        %v850 = vmax.f32 %v646, 0.0
        %v851 = vmax.f32 %v651, 0.0
        %v852 = vmax.f32 %v654, 0.0
        %v853 = vmax.f32 %v659, 0.0
        %v854 = vmax.f32 %v662, 0.0
        %v855 = vmax.f32 %v667, 0.0
        %v856 = vmax.f32 %v670, 0.0
        %v857 = vmax.f32 %v675, 0.0
        %v858 = vmax.f32 %v678, 0.0
        %v859 = vmax.f32 %v683, 0.0
        %v860 = vmax.f32 %v686, 0.0
        %v861 = vmax.f32 %v691, 0.0
        %v862 = vmax.f32 %v694, 0.0
        %v863 = vmax.f32 %v699, 0.0
        %v864 = vmax.f32 %v702, 0.0
        %v865 = vmax.f32 %v707, 0.0
        %v866 = vmax.f32 %v710, 0.0
        %v867 = vmax.f32 %v715, 0.0
        %v868 = vmax.f32 %v718, 0.0
        %v869 = vmax.f32 %v723, 0.0
        %v870 = vmax.f32 %v726, 0.0
        %v871 = vmax.f32 %v731, 0.0
        %v872 = vmax.f32 %v734, 0.0
        %v873 = vmax.f32 %v739, 0.0
        %v874 = vmax.f32 %v742, 0.0
        %v875 = vmax.f32 %v747, 0.0
        %v876 = vmax.f32 %v750, 0.0
        %v877 = vmax.f32 %v755, 0.0
        %v878 = vmax.f32 %v758, 0.0
        %v879 = vmax.f32 %v763, 0.0
        %v880 = vmax.f32 %v766, 0.0
        %v881 = vmax.f32 %v771, 0.0
        %v882 = vmax.f32 %v774, 0.0
        %v883 = vmax.f32 %v779, 0.0
        %v884 = vmax.f32 %v782, 0.0
        %v885 = vmax.f32 %v787, 0.0
        %v886 = vmax.f32 %v790, 0.0
        %v887 = vmax.f32 %v795, 0.0
        %v888 = vmax.f32 %v798, 0.0
        %v889 = vmax.f32 %v803, 0.0
        %v890 = vmax.f32 %v806, 0.0
        %v891 = vmax.f32 %v811, 0.0
        %v892 = vmax.f32 %v814, 0.0
        %v893 = vmax.f32 %v819, 0.0
        %v894 = vmax.f32 %v822, 0.0
        %v895 = vmax.f32 %v827, 0.0
        %v896 = vmax.f32 %v830, 0.0
        %v897 = vpack.c.bf16 %v834, %v833
        %v898 = vpack.c.bf16 %v836, %v835
        %v899 = vpack.c.bf16 %v838, %v837
        %v900 = vpack.c.bf16 %v840, %v839
        %v901 = vpack.c.bf16 %v842, %v841
        %v902 = vpack.c.bf16 %v844, %v843
        %v903 = vpack.c.bf16 %v846, %v845
        %v904 = vpack.c.bf16 %v848, %v847
        %v905 = vpack.c.bf16 %v850, %v849
        %v906 = vpack.c.bf16 %v852, %v851
        %v907 = vpack.c.bf16 %v854, %v853
        %v908 = vpack.c.bf16 %v856, %v855
        %v909 = vpack.c.bf16 %v858, %v857
        %v910 = vpack.c.bf16 %v860, %v859
        %v911 = vpack.c.bf16 %v862, %v861
        %v912 = vpack.c.bf16 %v864, %v863
        %v913 = vpack.c.bf16 %v866, %v865
        %v914 = vpack.c.bf16 %v868, %v867
        %v915 = vpack.c.bf16 %v870, %v869
        %v916 = vpack.c.bf16 %v872, %v871
        %v917 = vpack.c.bf16 %v874, %v873
        %v918 = vpack.c.bf16 %v876, %v875
        %v919 = vpack.c.bf16 %v878, %v877
        %v920 = vpack.c.bf16 %v880, %v879
        %v921 = vpack.c.bf16 %v882, %v881
        %v922 = vpack.c.bf16 %v884, %v883
        %v923 = vpack.c.bf16 %v886, %v885
        %v924 = vpack.c.bf16 %v888, %v887
        %v925 = vpack.c.bf16 %v890, %v889
        %v926 = vpack.c.bf16 %v892, %v891
        %v927 = vpack.c.bf16 %v894, %v893
        %v928 = vpack.c.bf16 %v896, %v895
        %v929 = vld [vmem:[%s3] sm:$0xf]
        %v930 = vld [vmem:[%s3 + $0x4] sm:$0xf]
        %v931 = vld [vmem:[%s3 + $0x8] sm:$0xf]
        %v932 = vld [vmem:[%s3 + $0xc] sm:$0xf]
        %v933 = vld [vmem:[%s3 + $0x10] sm:$0xf]
        %v934 = vld [vmem:[%s3 + $0x14] sm:$0xf]
        %v935 = vld [vmem:[%s3 + $0x18] sm:$0xf]
        %v936 = vld [vmem:[%s3 + $0x1c] sm:$0xf]
        %v937 = vld [vmem:[%s3 + $0x20] sm:$0xf]
        %v938 = vld [vmem:[%s3 + $0x24] sm:$0xf]
        %v939 = vld [vmem:[%s3 + $0x28] sm:$0xf]
        %v940 = vld [vmem:[%s3 + $0x2c] sm:$0xf]
        %v941 = vld [vmem:[%s3 + $0x30] sm:$0xf]
        %v942 = vld [vmem:[%s3 + $0x34] sm:$0xf]
        %v943 = vld [vmem:[%s3 + $0x38] sm:$0xf]
        %v944 = vld [vmem:[%s3 + $0x3c] sm:$0xf]
        %v945 = vld [vmem:[%s4] sm:$0x1]
        %v947 = vlaneseq
        %v948 = vshrl.u32 %v947, 7
        %v949 = vsub.s32 0, %v948
        %v950 = vrot.slane %v945, %v949
        %v968 = vunpack.c.l.b16 %v929
        %v969 = vunpack.c.l.b16 %v930
        %v970 = vunpack.c.l.b16 %v931
        %v971 = vunpack.c.l.b16 %v932
        %v972 = vunpack.c.l.b16 %v933
        %v973 = vunpack.c.l.b16 %v934
        %v974 = vunpack.c.l.b16 %v935
        %v975 = vunpack.c.l.b16 %v936
        %v976 = vunpack.c.l.b16 %v937
        %v977 = vunpack.c.l.b16 %v938
        %v978 = vunpack.c.l.b16 %v939
        %v979 = vunpack.c.l.b16 %v940
        %v980 = vunpack.c.l.b16 %v941
        %v981 = vunpack.c.l.b16 %v942
        %v982 = vunpack.c.l.b16 %v943
        %v983 = vunpack.c.l.b16 %v944
        %v984 = vpack.c.b16 %v969, %v968
        %v985 = vpack.c.b16 %v971, %v970
        %v986 = vpack.c.b16 %v973, %v972
        %v987 = vpack.c.b16 %v975, %v974
        %v988 = vpack.c.b16 %v977, %v976
        %v989 = vpack.c.b16 %v979, %v978
        %v990 = vpack.c.b16 %v981, %v980
        %v991 = vpack.c.b16 %v983, %v982
        %1000 = vmatprep.subr.bf16.mxu0 0
        %1001 = vmatpush1.bf16.msra.mxu0 %v984
        %1002 = vmatprep.subr.bf16.mxu0 0
        %1003 = vmatpush1.bf16.msra.mxu0 %v985
        %1004 = vmatprep.subr.bf16.mxu0 0
        %1005 = vmatpush1.bf16.msra.mxu0 %v986
        %1006 = vmatprep.subr.bf16.mxu0 0
        %1007 = vmatpush1.bf16.msra.mxu0 %v987
        %1008 = vmatprep.subr.bf16.mxu0 0
        %1009 = vmatpush1.bf16.msra.mxu0 %v988
        %1010 = vmatprep.subr.bf16.mxu0 0
        %1011 = vmatpush1.bf16.msra.mxu0 %v989
        %1012 = vmatprep.subr.bf16.mxu0 0
        %1013 = vmatpush1.bf16.msra.mxu0 %v990
        %1014 = vmatprep.subr.bf16.mxu0 0
        %1015 = vmatpush1.bf16.msra.mxu0 %v991
        %1016 = vmatprep.subr.bf16.mxu0 0
        %1017 = vmatpush1.bf16.msra.mxu0 0
        %1018 = vmatprep.subr.bf16.mxu0 0
        %1019 = vmatpush1.bf16.msra.mxu0 0
        %1020 = vmatprep.subr.bf16.mxu0 0
        %1021 = vmatpush1.bf16.msra.mxu0 0
        %1022 = vmatprep.subr.bf16.mxu0 0
        %1023 = vmatpush1.bf16.msra.mxu0 0
        %1024 = vmatprep.subr.bf16.mxu0 0
        %1025 = vmatpush1.bf16.msra.mxu0 0
        %1026 = vmatprep.subr.bf16.mxu0 0
        %1027 = vmatpush1.bf16.msra.mxu0 0
        %1028 = vmatprep.subr.bf16.mxu0 0
        %1029 = vmatpush1.bf16.msra.mxu0 0
        %1030 = vmatprep.subr.bf16.mxu0 0
        %1031 = vmatpush1.bf16.msra.mxu0 0
        %1032 = vmatprep.mubr.bf16.mxu0 0
        %1033 = vmatmul.mubr.bf16.gmra.mrb[0].mxu0 %v897
        %v1034 = vpop.f32.mrb[0].mxu0
        %v1035 = vadd.f32 %v950, %v1034
        %v1036 = vpop.f32.mrb[0].mxu0
        %v1037 = vpop.f32.mrb[0].mxu0
        %v1038 = vadd.f32 %v950, %v1037
        %v1039 = vpop.f32.mrb[0].mxu0
        %1040 = vmatprep.mubr.bf16.mxu0 0
        %1041 = vmatmul.mubr.bf16.gmra.mrb[0].mxu0 %v898
        %v1042 = vpop.f32.mrb[0].mxu0
        %v1043 = vadd.f32 %v950, %v1042
        %v1044 = vpop.f32.mrb[0].mxu0
        %v1045 = vpop.f32.mrb[0].mxu0
        %v1046 = vadd.f32 %v950, %v1045
        %v1047 = vpop.f32.mrb[0].mxu0
        %1048 = vmatprep.mubr.bf16.mxu0 0
        %1049 = vmatmul.mubr.bf16.gmra.mrb[0].mxu0 %v899
        %v1050 = vpop.f32.mrb[0].mxu0
        %v1051 = vadd.f32 %v950, %v1050
        %v1052 = vpop.f32.mrb[0].mxu0
        %v1053 = vpop.f32.mrb[0].mxu0
        %v1054 = vadd.f32 %v950, %v1053
        %v1055 = vpop.f32.mrb[0].mxu0
        %1056 = vmatprep.mubr.bf16.mxu0 0
        %1057 = vmatmul.mubr.bf16.gmra.mrb[0].mxu0 %v900
        %v1058 = vpop.f32.mrb[0].mxu0
        %v1059 = vadd.f32 %v950, %v1058
        %v1060 = vpop.f32.mrb[0].mxu0
        %v1061 = vpop.f32.mrb[0].mxu0
        %v1062 = vadd.f32 %v950, %v1061
        %v1063 = vpop.f32.mrb[0].mxu0
        %1064 = vmatprep.mubr.bf16.mxu0 0
        %1065 = vmatmul.mubr.bf16.gmra.mrb[0].mxu0 %v901
        %v1066 = vpop.f32.mrb[0].mxu0
        %v1067 = vadd.f32 %v950, %v1066
        %v1068 = vpop.f32.mrb[0].mxu0
        %v1069 = vpop.f32.mrb[0].mxu0
        %v1070 = vadd.f32 %v950, %v1069
        %v1071 = vpop.f32.mrb[0].mxu0
        %1072 = vmatprep.mubr.bf16.mxu0 0
        %1073 = vmatmul.mubr.bf16.gmra.mrb[0].mxu0 %v902
        %v1074 = vpop.f32.mrb[0].mxu0
        %v1075 = vadd.f32 %v950, %v1074
        %v1076 = vpop.f32.mrb[0].mxu0
        %v1077 = vpop.f32.mrb[0].mxu0
        %v1078 = vadd.f32 %v950, %v1077
        %v1079 = vpop.f32.mrb[0].mxu0
        %1080 = vmatprep.mubr.bf16.mxu0 0
        %1081 = vmatmul.mubr.bf16.gmra.mrb[0].mxu0 %v903
        %v1082 = vpop.f32.mrb[0].mxu0
        %v1083 = vadd.f32 %v950, %v1082
        %v1084 = vpop.f32.mrb[0].mxu0
        %v1085 = vpop.f32.mrb[0].mxu0
        %v1086 = vadd.f32 %v950, %v1085
        %v1087 = vpop.f32.mrb[0].mxu0
        %1088 = vmatprep.mubr.bf16.mxu0 0
        %1089 = vmatmul.mubr.bf16.gmra.mrb[0].mxu0 %v904
        %v1090 = vpop.f32.mrb[0].mxu0
        %v1091 = vadd.f32 %v950, %v1090
        %v1092 = vpop.f32.mrb[0].mxu0
        %v1093 = vpop.f32.mrb[0].mxu0
        %v1094 = vadd.f32 %v950, %v1093
        %v1095 = vpop.f32.mrb[0].mxu0
        %1096 = vmatprep.mubr.bf16.mxu0 0
        %1097 = vmatmul.mubr.bf16.gmra.mrb[0].mxu0 %v905
        %v1098 = vpop.f32.mrb[0].mxu0
        %v1099 = vadd.f32 %v950, %v1098
        %v1100 = vpop.f32.mrb[0].mxu0
        %v1101 = vpop.f32.mrb[0].mxu0
        %v1102 = vadd.f32 %v950, %v1101
        %v1103 = vpop.f32.mrb[0].mxu0
        %1104 = vmatprep.mubr.bf16.mxu0 0
        %1105 = vmatmul.mubr.bf16.gmra.mrb[0].mxu0 %v906
        %v1106 = vpop.f32.mrb[0].mxu0
        %v1107 = vadd.f32 %v950, %v1106
        %v1108 = vpop.f32.mrb[0].mxu0
        %v1109 = vpop.f32.mrb[0].mxu0
        %v1110 = vadd.f32 %v950, %v1109
        %v1111 = vpop.f32.mrb[0].mxu0
        %1112 = vmatprep.mubr.bf16.mxu0 0
        %1113 = vmatmul.mubr.bf16.gmra.mrb[0].mxu0 %v907
        %v1114 = vpop.f32.mrb[0].mxu0
        %v1115 = vadd.f32 %v950, %v1114
        %v1116 = vpop.f32.mrb[0].mxu0
        %v1117 = vpop.f32.mrb[0].mxu0
        %v1118 = vadd.f32 %v950, %v1117
        %v1119 = vpop.f32.mrb[0].mxu0
        %1120 = vmatprep.mubr.bf16.mxu0 0
        %1121 = vmatmul.mubr.bf16.gmra.mrb[0].mxu0 %v908
        %v1122 = vpop.f32.mrb[0].mxu0
        %v1123 = vadd.f32 %v950, %v1122
        %v1124 = vpop.f32.mrb[0].mxu0
        %v1125 = vpop.f32.mrb[0].mxu0
        %v1126 = vadd.f32 %v950, %v1125
        %v1127 = vpop.f32.mrb[0].mxu0
        %1128 = vmatprep.mubr.bf16.mxu0 0
        %1129 = vmatmul.mubr.bf16.gmra.mrb[0].mxu0 %v909
        %v1130 = vpop.f32.mrb[0].mxu0
        %v1131 = vadd.f32 %v950, %v1130
        %v1132 = vpop.f32.mrb[0].mxu0
        %v1133 = vpop.f32.mrb[0].mxu0
        %v1134 = vadd.f32 %v950, %v1133
        %v1135 = vpop.f32.mrb[0].mxu0
        %1136 = vmatprep.mubr.bf16.mxu0 0
        %1137 = vmatmul.mubr.bf16.gmra.mrb[0].mxu0 %v910
        %v1138 = vpop.f32.mrb[0].mxu0
        %v1139 = vadd.f32 %v950, %v1138
        %v1140 = vpop.f32.mrb[0].mxu0
        %v1141 = vpop.f32.mrb[0].mxu0
        %v1142 = vadd.f32 %v950, %v1141
        %v1143 = vpop.f32.mrb[0].mxu0
        %1144 = vmatprep.mubr.bf16.mxu0 0
        %1145 = vmatmul.mubr.bf16.gmra.mrb[0].mxu0 %v911
        %v1146 = vpop.f32.mrb[0].mxu0
        %v1147 = vadd.f32 %v950, %v1146
        %v1148 = vpop.f32.mrb[0].mxu0
        %v1149 = vpop.f32.mrb[0].mxu0
        %v1150 = vadd.f32 %v950, %v1149
        %v1151 = vpop.f32.mrb[0].mxu0
        %1152 = vmatprep.mubr.bf16.mxu0 0
        %1153 = vmatmul.mubr.bf16.gmra.mrb[0].mxu0 %v912
        %v1154 = vpop.f32.mrb[0].mxu0
        %v1155 = vadd.f32 %v950, %v1154
        %v1156 = vpop.f32.mrb[0].mxu0
        %v1157 = vpop.f32.mrb[0].mxu0
        %v1158 = vadd.f32 %v950, %v1157
        %v1159 = vpop.f32.mrb[0].mxu0
        %1160 = vmatprep.mubr.bf16.mxu0 0
        %1161 = vmatmul.mubr.bf16.gmra.mrb[0].mxu0 %v913
        %v1162 = vpop.f32.mrb[0].mxu0
        %v1163 = vadd.f32 %v950, %v1162
        %v1164 = vpop.f32.mrb[0].mxu0
        %v1165 = vpop.f32.mrb[0].mxu0
        %v1166 = vadd.f32 %v950, %v1165
        %v1167 = vpop.f32.mrb[0].mxu0
        %1168 = vmatprep.mubr.bf16.mxu0 0
        %1169 = vmatmul.mubr.bf16.gmra.mrb[0].mxu0 %v914
        %v1170 = vpop.f32.mrb[0].mxu0
        %v1171 = vadd.f32 %v950, %v1170
        %v1172 = vpop.f32.mrb[0].mxu0
        %v1173 = vpop.f32.mrb[0].mxu0
        %v1174 = vadd.f32 %v950, %v1173
        %v1175 = vpop.f32.mrb[0].mxu0
        %1176 = vmatprep.mubr.bf16.mxu0 0
        %1177 = vmatmul.mubr.bf16.gmra.mrb[0].mxu0 %v915
        %v1178 = vpop.f32.mrb[0].mxu0
        %v1179 = vadd.f32 %v950, %v1178
        %v1180 = vpop.f32.mrb[0].mxu0
        %v1181 = vpop.f32.mrb[0].mxu0
        %v1182 = vadd.f32 %v950, %v1181
        %v1183 = vpop.f32.mrb[0].mxu0
        %1184 = vmatprep.mubr.bf16.mxu0 0
        %1185 = vmatmul.mubr.bf16.gmra.mrb[0].mxu0 %v916
        %v1186 = vpop.f32.mrb[0].mxu0
        %v1187 = vadd.f32 %v950, %v1186
        %v1188 = vpop.f32.mrb[0].mxu0
        %v1189 = vpop.f32.mrb[0].mxu0
        %v1190 = vadd.f32 %v950, %v1189
        %v1191 = vpop.f32.mrb[0].mxu0
        %1192 = vmatprep.mubr.bf16.mxu0 0
        %1193 = vmatmul.mubr.bf16.gmra.mrb[0].mxu0 %v917
        %v1194 = vpop.f32.mrb[0].mxu0
        %v1195 = vadd.f32 %v950, %v1194
        %v1196 = vpop.f32.mrb[0].mxu0
        %v1197 = vpop.f32.mrb[0].mxu0
        %v1198 = vadd.f32 %v950, %v1197
        %v1199 = vpop.f32.mrb[0].mxu0
        %1200 = vmatprep.mubr.bf16.mxu0 0
        %1201 = vmatmul.mubr.bf16.gmra.mrb[0].mxu0 %v918
        %v1202 = vpop.f32.mrb[0].mxu0
        %v1203 = vadd.f32 %v950, %v1202
        %v1204 = vpop.f32.mrb[0].mxu0
        %v1205 = vpop.f32.mrb[0].mxu0
        %v1206 = vadd.f32 %v950, %v1205
        %v1207 = vpop.f32.mrb[0].mxu0
        %1208 = vmatprep.mubr.bf16.mxu0 0
        %1209 = vmatmul.mubr.bf16.gmra.mrb[0].mxu0 %v919
        %v1210 = vpop.f32.mrb[0].mxu0
        %v1211 = vadd.f32 %v950, %v1210
        %v1212 = vpop.f32.mrb[0].mxu0
        %v1213 = vpop.f32.mrb[0].mxu0
        %v1214 = vadd.f32 %v950, %v1213
        %v1215 = vpop.f32.mrb[0].mxu0
        %1216 = vmatprep.mubr.bf16.mxu0 0
        %1217 = vmatmul.mubr.bf16.gmra.mrb[0].mxu0 %v920
        %v1218 = vpop.f32.mrb[0].mxu0
        %v1219 = vadd.f32 %v950, %v1218
        %v1220 = vpop.f32.mrb[0].mxu0
        %v1221 = vpop.f32.mrb[0].mxu0
        %v1222 = vadd.f32 %v950, %v1221
        %v1223 = vpop.f32.mrb[0].mxu0
        %1224 = vmatprep.mubr.bf16.mxu0 0
        %1225 = vmatmul.mubr.bf16.gmra.mrb[0].mxu0 %v921
        %v1226 = vpop.f32.mrb[0].mxu0
        %v1227 = vadd.f32 %v950, %v1226
        %v1228 = vpop.f32.mrb[0].mxu0
        %v1229 = vpop.f32.mrb[0].mxu0
        %v1230 = vadd.f32 %v950, %v1229
        %v1231 = vpop.f32.mrb[0].mxu0
        %1232 = vmatprep.mubr.bf16.mxu0 0
        %1233 = vmatmul.mubr.bf16.gmra.mrb[0].mxu0 %v922
        %v1234 = vpop.f32.mrb[0].mxu0
        %v1235 = vadd.f32 %v950, %v1234
        %v1236 = vpop.f32.mrb[0].mxu0
        %v1237 = vpop.f32.mrb[0].mxu0
        %v1238 = vadd.f32 %v950, %v1237
        %v1239 = vpop.f32.mrb[0].mxu0
        %1240 = vmatprep.mubr.bf16.mxu0 0
        %1241 = vmatmul.mubr.bf16.gmra.mrb[0].mxu0 %v923
        %v1242 = vpop.f32.mrb[0].mxu0
        %v1243 = vadd.f32 %v950, %v1242
        %v1244 = vpop.f32.mrb[0].mxu0
        %v1245 = vpop.f32.mrb[0].mxu0
        %v1246 = vadd.f32 %v950, %v1245
        %v1247 = vpop.f32.mrb[0].mxu0
        %1248 = vmatprep.mubr.bf16.mxu0 0
        %1249 = vmatmul.mubr.bf16.gmra.mrb[0].mxu0 %v924
        %v1250 = vpop.f32.mrb[0].mxu0
        %v1251 = vadd.f32 %v950, %v1250
        %v1252 = vpop.f32.mrb[0].mxu0
        %v1253 = vpop.f32.mrb[0].mxu0
        %v1254 = vadd.f32 %v950, %v1253
        %v1255 = vpop.f32.mrb[0].mxu0
        %1256 = vmatprep.mubr.bf16.mxu0 0
        %1257 = vmatmul.mubr.bf16.gmra.mrb[0].mxu0 %v925
        %v1258 = vpop.f32.mrb[0].mxu0
        %v1259 = vadd.f32 %v950, %v1258
        %v1260 = vpop.f32.mrb[0].mxu0
        %v1261 = vpop.f32.mrb[0].mxu0
        %v1262 = vadd.f32 %v950, %v1261
        %v1263 = vpop.f32.mrb[0].mxu0
        %1264 = vmatprep.mubr.bf16.mxu0 0
        %1265 = vmatmul.mubr.bf16.gmra.mrb[0].mxu0 %v926
        %v1266 = vpop.f32.mrb[0].mxu0
        %v1267 = vadd.f32 %v950, %v1266
        %v1268 = vpop.f32.mrb[0].mxu0
        %v1269 = vpop.f32.mrb[0].mxu0
        %v1270 = vadd.f32 %v950, %v1269
        %v1271 = vpop.f32.mrb[0].mxu0
        %1272 = vmatprep.mubr.bf16.mxu0 0
        %1273 = vmatmul.mubr.bf16.gmra.mrb[0].mxu0 %v927
        %v1274 = vpop.f32.mrb[0].mxu0
        %v1275 = vadd.f32 %v950, %v1274
        %v1276 = vpop.f32.mrb[0].mxu0
        %v1277 = vpop.f32.mrb[0].mxu0
        %v1278 = vadd.f32 %v950, %v1277
        %v1279 = vpop.f32.mrb[0].mxu0
        %1280 = vmatprep.mubr.bf16.mxu0 0
        %1281 = vmatmul.mubr.bf16.gmra.mrb[0].mxu0 %v928
        %v1282 = vpop.f32.mrb[0].mxu0
        %v1283 = vadd.f32 %v950, %v1282
        %v1284 = vpop.f32.mrb[0].mxu0
        %v1285 = vpop.f32.mrb[0].mxu0
        %v1286 = vadd.f32 %v950, %v1285
        %v1287 = vpop.f32.mrb[0].mxu0
        %1288 = vdwg.mxu0
        %v1289 = vmax.f32 %v1035, 0.0
        %v1290 = vmax.f32 %v1038, 0.0
        %v1291 = vmax.f32 %v1043, 0.0
        %v1292 = vmax.f32 %v1046, 0.0
        %v1293 = vmax.f32 %v1051, 0.0
        %v1294 = vmax.f32 %v1054, 0.0
        %v1295 = vmax.f32 %v1059, 0.0
        %v1296 = vmax.f32 %v1062, 0.0
        %v1297 = vmax.f32 %v1067, 0.0
        %v1298 = vmax.f32 %v1070, 0.0
        %v1299 = vmax.f32 %v1075, 0.0
        %v1300 = vmax.f32 %v1078, 0.0
        %v1301 = vmax.f32 %v1083, 0.0
        %v1302 = vmax.f32 %v1086, 0.0
        %v1303 = vmax.f32 %v1091, 0.0
        %v1304 = vmax.f32 %v1094, 0.0
        %v1305 = vmax.f32 %v1099, 0.0
        %v1306 = vmax.f32 %v1102, 0.0
        %v1307 = vmax.f32 %v1107, 0.0
        %v1308 = vmax.f32 %v1110, 0.0
        %v1309 = vmax.f32 %v1115, 0.0
        %v1310 = vmax.f32 %v1118, 0.0
        %v1311 = vmax.f32 %v1123, 0.0
        %v1312 = vmax.f32 %v1126, 0.0
        %v1313 = vmax.f32 %v1131, 0.0
        %v1314 = vmax.f32 %v1134, 0.0
        %v1315 = vmax.f32 %v1139, 0.0
        %v1316 = vmax.f32 %v1142, 0.0
        %v1317 = vmax.f32 %v1147, 0.0
        %v1318 = vmax.f32 %v1150, 0.0
        %v1319 = vmax.f32 %v1155, 0.0
        %v1320 = vmax.f32 %v1158, 0.0
        %v1321 = vmax.f32 %v1163, 0.0
        %v1322 = vmax.f32 %v1166, 0.0
        %v1323 = vmax.f32 %v1171, 0.0
        %v1324 = vmax.f32 %v1174, 0.0
        %v1325 = vmax.f32 %v1179, 0.0
        %v1326 = vmax.f32 %v1182, 0.0
        %v1327 = vmax.f32 %v1187, 0.0
        %v1328 = vmax.f32 %v1190, 0.0
        %v1329 = vmax.f32 %v1195, 0.0
        %v1330 = vmax.f32 %v1198, 0.0
        %v1331 = vmax.f32 %v1203, 0.0
        %v1332 = vmax.f32 %v1206, 0.0
        %v1333 = vmax.f32 %v1211, 0.0
        %v1334 = vmax.f32 %v1214, 0.0
        %v1335 = vmax.f32 %v1219, 0.0
        %v1336 = vmax.f32 %v1222, 0.0
        %v1337 = vmax.f32 %v1227, 0.0
        %v1338 = vmax.f32 %v1230, 0.0
        %v1339 = vmax.f32 %v1235, 0.0
        %v1340 = vmax.f32 %v1238, 0.0
        %v1341 = vmax.f32 %v1243, 0.0
        %v1342 = vmax.f32 %v1246, 0.0
        %v1343 = vmax.f32 %v1251, 0.0
        %v1344 = vmax.f32 %v1254, 0.0
        %v1345 = vmax.f32 %v1259, 0.0
        %v1346 = vmax.f32 %v1262, 0.0
        %v1347 = vmax.f32 %v1267, 0.0
        %v1348 = vmax.f32 %v1270, 0.0
        %v1349 = vmax.f32 %v1275, 0.0
        %v1350 = vmax.f32 %v1278, 0.0
        %v1351 = vmax.f32 %v1283, 0.0
        %v1352 = vmax.f32 %v1286, 0.0
        %v1353 = vpack.c.bf16 %v1290, %v1289
        %v1354 = vpack.c.bf16 %v1292, %v1291
        %v1355 = vpack.c.bf16 %v1294, %v1293
        %v1356 = vpack.c.bf16 %v1296, %v1295
        %v1357 = vpack.c.bf16 %v1298, %v1297
        %v1358 = vpack.c.bf16 %v1300, %v1299
        %v1359 = vpack.c.bf16 %v1302, %v1301
        %v1360 = vpack.c.bf16 %v1304, %v1303
        %v1361 = vpack.c.bf16 %v1306, %v1305
        %v1362 = vpack.c.bf16 %v1308, %v1307
        %v1363 = vpack.c.bf16 %v1310, %v1309
        %v1364 = vpack.c.bf16 %v1312, %v1311
        %v1365 = vpack.c.bf16 %v1314, %v1313
        %v1366 = vpack.c.bf16 %v1316, %v1315
        %v1367 = vpack.c.bf16 %v1318, %v1317
        %v1368 = vpack.c.bf16 %v1320, %v1319
        %v1369 = vpack.c.bf16 %v1322, %v1321
        %v1370 = vpack.c.bf16 %v1324, %v1323
        %v1371 = vpack.c.bf16 %v1326, %v1325
        %v1372 = vpack.c.bf16 %v1328, %v1327
        %v1373 = vpack.c.bf16 %v1330, %v1329
        %v1374 = vpack.c.bf16 %v1332, %v1331
        %v1375 = vpack.c.bf16 %v1334, %v1333
        %v1376 = vpack.c.bf16 %v1336, %v1335
        %v1377 = vpack.c.bf16 %v1338, %v1337
        %v1378 = vpack.c.bf16 %v1340, %v1339
        %v1379 = vpack.c.bf16 %v1342, %v1341
        %v1380 = vpack.c.bf16 %v1344, %v1343
        %v1381 = vpack.c.bf16 %v1346, %v1345
        %v1382 = vpack.c.bf16 %v1348, %v1347
        %v1383 = vpack.c.bf16 %v1350, %v1349
        %v1384 = vpack.c.bf16 %v1352, %v1351
        %v1385 = vld [vmem:[%s5] sm:$0xf]
        %v1386 = vld [vmem:[%s5 + $0x4] sm:$0xf]
        %v1387 = vld [vmem:[%s5 + $0x8] sm:$0xf]
        %v1388 = vld [vmem:[%s5 + $0xc] sm:$0xf]
        %v1389 = vld [vmem:[%s5 + $0x10] sm:$0xf]
        %v1390 = vld [vmem:[%s5 + $0x14] sm:$0xf]
        %v1391 = vld [vmem:[%s5 + $0x18] sm:$0xf]
        %v1392 = vld [vmem:[%s5 + $0x1c] sm:$0xf]
        %v1393 = vld [vmem:[%s5 + $0x20] sm:$0xf]
        %v1394 = vld [vmem:[%s5 + $0x24] sm:$0xf]
        %v1395 = vld [vmem:[%s5 + $0x28] sm:$0xf]
        %v1396 = vld [vmem:[%s5 + $0x2c] sm:$0xf]
        %v1397 = vld [vmem:[%s5 + $0x30] sm:$0xf]
        %v1398 = vld [vmem:[%s5 + $0x34] sm:$0xf]
        %v1399 = vld [vmem:[%s5 + $0x38] sm:$0xf]
        %v1400 = vld [vmem:[%s5 + $0x3c] sm:$0xf]
        %v1401 = vld [vmem:[%s6] sm:$0x1]
        %v1403 = vlaneseq
        %v1404 = vshrl.u32 %v1403, 7
        %v1405 = vsub.s32 0, %v1404
        %v1406 = vrot.slane %v1401, %v1405
        %v1424 = vunpack.c.l.b16 %v1385
        %v1425 = vunpack.c.l.b16 %v1386
        %v1426 = vunpack.c.l.b16 %v1387
        %v1427 = vunpack.c.l.b16 %v1388
        %v1428 = vunpack.c.l.b16 %v1389
        %v1429 = vunpack.c.l.b16 %v1390
        %v1430 = vunpack.c.l.b16 %v1391
        %v1431 = vunpack.c.l.b16 %v1392
        %v1432 = vunpack.c.l.b16 %v1393
        %v1433 = vunpack.c.l.b16 %v1394
        %v1434 = vunpack.c.l.b16 %v1395
        %v1435 = vunpack.c.l.b16 %v1396
        %v1436 = vunpack.c.l.b16 %v1397
        %v1437 = vunpack.c.l.b16 %v1398
        %v1438 = vunpack.c.l.b16 %v1399
        %v1439 = vunpack.c.l.b16 %v1400
        %v1440 = vpack.c.b16 %v1425, %v1424
        %v1441 = vpack.c.b16 %v1427, %v1426
        %v1442 = vpack.c.b16 %v1429, %v1428
        %v1443 = vpack.c.b16 %v1431, %v1430
        %v1444 = vpack.c.b16 %v1433, %v1432
        %v1445 = vpack.c.b16 %v1435, %v1434
        %v1446 = vpack.c.b16 %v1437, %v1436
        %v1447 = vpack.c.b16 %v1439, %v1438
        %1456 = vmatprep.subr.bf16.mxu0 0
        %1457 = vmatpush1.bf16.msra.mxu0 %v1440
        %1458 = vmatprep.subr.bf16.mxu0 0
        %1459 = vmatpush1.bf16.msra.mxu0 %v1441
        %1460 = vmatprep.subr.bf16.mxu0 0
        %1461 = vmatpush1.bf16.msra.mxu0 %v1442
        %1462 = vmatprep.subr.bf16.mxu0 0
        %1463 = vmatpush1.bf16.msra.mxu0 %v1443
        %1464 = vmatprep.subr.bf16.mxu0 0
        %1465 = vmatpush1.bf16.msra.mxu0 %v1444
        %1466 = vmatprep.subr.bf16.mxu0 0
        %1467 = vmatpush1.bf16.msra.mxu0 %v1445
        %1468 = vmatprep.subr.bf16.mxu0 0
        %1469 = vmatpush1.bf16.msra.mxu0 %v1446
        %1470 = vmatprep.subr.bf16.mxu0 0
        %1471 = vmatpush1.bf16.msra.mxu0 %v1447
        %1472 = vmatprep.subr.bf16.mxu0 0
        %1473 = vmatpush1.bf16.msra.mxu0 0
        %1474 = vmatprep.subr.bf16.mxu0 0
        %1475 = vmatpush1.bf16.msra.mxu0 0
        %1476 = vmatprep.subr.bf16.mxu0 0
        %1477 = vmatpush1.bf16.msra.mxu0 0
        %1478 = vmatprep.subr.bf16.mxu0 0
        %1479 = vmatpush1.bf16.msra.mxu0 0
        %1480 = vmatprep.subr.bf16.mxu0 0
        %1481 = vmatpush1.bf16.msra.mxu0 0
        %1482 = vmatprep.subr.bf16.mxu0 0
        %1483 = vmatpush1.bf16.msra.mxu0 0
        %1484 = vmatprep.subr.bf16.mxu0 0
        %1485 = vmatpush1.bf16.msra.mxu0 0
        %1486 = vmatprep.subr.bf16.mxu0 0
        %1487 = vmatpush1.bf16.msra.mxu0 0
        %1488 = vmatprep.mubr.bf16.mxu0 0
        %1489 = vmatmul.mubr.bf16.gmra.mrb[0].mxu0 %v1353
        %v1490 = vpop.f32.mrb[0].mxu0
        %v1491 = vadd.f32 %v1406, %v1490
        %v1492 = vpop.f32.mrb[0].mxu0
        %v1493 = vpop.f32.mrb[0].mxu0
        %v1494 = vadd.f32 %v1406, %v1493
        %v1495 = vpop.f32.mrb[0].mxu0
        %1496 = vmatprep.mubr.bf16.mxu0 0
        %1497 = vmatmul.mubr.bf16.gmra.mrb[0].mxu0 %v1354
        %v1498 = vpop.f32.mrb[0].mxu0
        %v1499 = vadd.f32 %v1406, %v1498
        %v1500 = vpop.f32.mrb[0].mxu0
        %v1501 = vpop.f32.mrb[0].mxu0
        %v1502 = vadd.f32 %v1406, %v1501
        %v1503 = vpop.f32.mrb[0].mxu0
        %1504 = vmatprep.mubr.bf16.mxu0 0
        %1505 = vmatmul.mubr.bf16.gmra.mrb[0].mxu0 %v1355
        %v1506 = vpop.f32.mrb[0].mxu0
        %v1507 = vadd.f32 %v1406, %v1506
        %v1508 = vpop.f32.mrb[0].mxu0
        %v1509 = vpop.f32.mrb[0].mxu0
        %v1510 = vadd.f32 %v1406, %v1509
        %v1511 = vpop.f32.mrb[0].mxu0
        %1512 = vmatprep.mubr.bf16.mxu0 0
        %1513 = vmatmul.mubr.bf16.gmra.mrb[0].mxu0 %v1356
        %v1514 = vpop.f32.mrb[0].mxu0
        %v1515 = vadd.f32 %v1406, %v1514
        %v1516 = vpop.f32.mrb[0].mxu0
        %v1517 = vpop.f32.mrb[0].mxu0
        %v1518 = vadd.f32 %v1406, %v1517
        %v1519 = vpop.f32.mrb[0].mxu0
        %1520 = vmatprep.mubr.bf16.mxu0 0
        %1521 = vmatmul.mubr.bf16.gmra.mrb[0].mxu0 %v1357
        %v1522 = vpop.f32.mrb[0].mxu0
        %v1523 = vadd.f32 %v1406, %v1522
        %v1524 = vpop.f32.mrb[0].mxu0
        %v1525 = vpop.f32.mrb[0].mxu0
        %v1526 = vadd.f32 %v1406, %v1525
        %v1527 = vpop.f32.mrb[0].mxu0
        %1528 = vmatprep.mubr.bf16.mxu0 0
        %1529 = vmatmul.mubr.bf16.gmra.mrb[0].mxu0 %v1358
        %v1530 = vpop.f32.mrb[0].mxu0
        %v1531 = vadd.f32 %v1406, %v1530
        %v1532 = vpop.f32.mrb[0].mxu0
        %v1533 = vpop.f32.mrb[0].mxu0
        %v1534 = vadd.f32 %v1406, %v1533
        %v1535 = vpop.f32.mrb[0].mxu0
        %1536 = vmatprep.mubr.bf16.mxu0 0
        %1537 = vmatmul.mubr.bf16.gmra.mrb[0].mxu0 %v1359
        %v1538 = vpop.f32.mrb[0].mxu0
        %v1539 = vadd.f32 %v1406, %v1538
        %v1540 = vpop.f32.mrb[0].mxu0
        %v1541 = vpop.f32.mrb[0].mxu0
        %v1542 = vadd.f32 %v1406, %v1541
        %v1543 = vpop.f32.mrb[0].mxu0
        %1544 = vmatprep.mubr.bf16.mxu0 0
        %1545 = vmatmul.mubr.bf16.gmra.mrb[0].mxu0 %v1360
        %v1546 = vpop.f32.mrb[0].mxu0
        %v1547 = vadd.f32 %v1406, %v1546
        %v1548 = vpop.f32.mrb[0].mxu0
        %v1549 = vpop.f32.mrb[0].mxu0
        %v1550 = vadd.f32 %v1406, %v1549
        %v1551 = vpop.f32.mrb[0].mxu0
        %1552 = vmatprep.mubr.bf16.mxu0 0
        %1553 = vmatmul.mubr.bf16.gmra.mrb[0].mxu0 %v1361
        %v1554 = vpop.f32.mrb[0].mxu0
        %v1555 = vadd.f32 %v1406, %v1554
        %v1556 = vpop.f32.mrb[0].mxu0
        %v1557 = vpop.f32.mrb[0].mxu0
        %v1558 = vadd.f32 %v1406, %v1557
        %v1559 = vpop.f32.mrb[0].mxu0
        %1560 = vmatprep.mubr.bf16.mxu0 0
        %1561 = vmatmul.mubr.bf16.gmra.mrb[0].mxu0 %v1362
        %v1562 = vpop.f32.mrb[0].mxu0
        %v1563 = vadd.f32 %v1406, %v1562
        %v1564 = vpop.f32.mrb[0].mxu0
        %v1565 = vpop.f32.mrb[0].mxu0
        %v1566 = vadd.f32 %v1406, %v1565
        %v1567 = vpop.f32.mrb[0].mxu0
        %1568 = vmatprep.mubr.bf16.mxu0 0
        %1569 = vmatmul.mubr.bf16.gmra.mrb[0].mxu0 %v1363
        %v1570 = vpop.f32.mrb[0].mxu0
        %v1571 = vadd.f32 %v1406, %v1570
        %v1572 = vpop.f32.mrb[0].mxu0
        %v1573 = vpop.f32.mrb[0].mxu0
        %v1574 = vadd.f32 %v1406, %v1573
        %v1575 = vpop.f32.mrb[0].mxu0
        %1576 = vmatprep.mubr.bf16.mxu0 0
        %1577 = vmatmul.mubr.bf16.gmra.mrb[0].mxu0 %v1364
        %v1578 = vpop.f32.mrb[0].mxu0
        %v1579 = vadd.f32 %v1406, %v1578
        %v1580 = vpop.f32.mrb[0].mxu0
        %v1581 = vpop.f32.mrb[0].mxu0
        %v1582 = vadd.f32 %v1406, %v1581
        %v1583 = vpop.f32.mrb[0].mxu0
        %1584 = vmatprep.mubr.bf16.mxu0 0
        %1585 = vmatmul.mubr.bf16.gmra.mrb[0].mxu0 %v1365
        %v1586 = vpop.f32.mrb[0].mxu0
        %v1587 = vadd.f32 %v1406, %v1586
        %v1588 = vpop.f32.mrb[0].mxu0
        %v1589 = vpop.f32.mrb[0].mxu0
        %v1590 = vadd.f32 %v1406, %v1589
        %v1591 = vpop.f32.mrb[0].mxu0
        %1592 = vmatprep.mubr.bf16.mxu0 0
        %1593 = vmatmul.mubr.bf16.gmra.mrb[0].mxu0 %v1366
        %v1594 = vpop.f32.mrb[0].mxu0
        %v1595 = vadd.f32 %v1406, %v1594
        %v1596 = vpop.f32.mrb[0].mxu0
        %v1597 = vpop.f32.mrb[0].mxu0
        %v1598 = vadd.f32 %v1406, %v1597
        %v1599 = vpop.f32.mrb[0].mxu0
        %1600 = vmatprep.mubr.bf16.mxu0 0
        %1601 = vmatmul.mubr.bf16.gmra.mrb[0].mxu0 %v1367
        %v1602 = vpop.f32.mrb[0].mxu0
        %v1603 = vadd.f32 %v1406, %v1602
        %v1604 = vpop.f32.mrb[0].mxu0
        %v1605 = vpop.f32.mrb[0].mxu0
        %v1606 = vadd.f32 %v1406, %v1605
        %v1607 = vpop.f32.mrb[0].mxu0
        %1608 = vmatprep.mubr.bf16.mxu0 0
        %1609 = vmatmul.mubr.bf16.gmra.mrb[0].mxu0 %v1368
        %v1610 = vpop.f32.mrb[0].mxu0
        %v1611 = vadd.f32 %v1406, %v1610
        %v1612 = vpop.f32.mrb[0].mxu0
        %v1613 = vpop.f32.mrb[0].mxu0
        %v1614 = vadd.f32 %v1406, %v1613
        %v1615 = vpop.f32.mrb[0].mxu0
        %1616 = vmatprep.mubr.bf16.mxu0 0
        %1617 = vmatmul.mubr.bf16.gmra.mrb[0].mxu0 %v1369
        %v1618 = vpop.f32.mrb[0].mxu0
        %v1619 = vadd.f32 %v1406, %v1618
        %v1620 = vpop.f32.mrb[0].mxu0
        %v1621 = vpop.f32.mrb[0].mxu0
        %v1622 = vadd.f32 %v1406, %v1621
        %v1623 = vpop.f32.mrb[0].mxu0
        %1624 = vmatprep.mubr.bf16.mxu0 0
        %1625 = vmatmul.mubr.bf16.gmra.mrb[0].mxu0 %v1370
        %v1626 = vpop.f32.mrb[0].mxu0
        %v1627 = vadd.f32 %v1406, %v1626
        %v1628 = vpop.f32.mrb[0].mxu0
        %v1629 = vpop.f32.mrb[0].mxu0
        %v1630 = vadd.f32 %v1406, %v1629
        %v1631 = vpop.f32.mrb[0].mxu0
        %1632 = vmatprep.mubr.bf16.mxu0 0
        %1633 = vmatmul.mubr.bf16.gmra.mrb[0].mxu0 %v1371
        %v1634 = vpop.f32.mrb[0].mxu0
        %v1635 = vadd.f32 %v1406, %v1634
        %v1636 = vpop.f32.mrb[0].mxu0
        %v1637 = vpop.f32.mrb[0].mxu0
        %v1638 = vadd.f32 %v1406, %v1637
        %v1639 = vpop.f32.mrb[0].mxu0
        %1640 = vmatprep.mubr.bf16.mxu0 0
        %1641 = vmatmul.mubr.bf16.gmra.mrb[0].mxu0 %v1372
        %v1642 = vpop.f32.mrb[0].mxu0
        %v1643 = vadd.f32 %v1406, %v1642
        %v1644 = vpop.f32.mrb[0].mxu0
        %v1645 = vpop.f32.mrb[0].mxu0
        %v1646 = vadd.f32 %v1406, %v1645
        %v1647 = vpop.f32.mrb[0].mxu0
        %1648 = vmatprep.mubr.bf16.mxu0 0
        %1649 = vmatmul.mubr.bf16.gmra.mrb[0].mxu0 %v1373
        %v1650 = vpop.f32.mrb[0].mxu0
        %v1651 = vadd.f32 %v1406, %v1650
        %v1652 = vpop.f32.mrb[0].mxu0
        %v1653 = vpop.f32.mrb[0].mxu0
        %v1654 = vadd.f32 %v1406, %v1653
        %v1655 = vpop.f32.mrb[0].mxu0
        %1656 = vmatprep.mubr.bf16.mxu0 0
        %1657 = vmatmul.mubr.bf16.gmra.mrb[0].mxu0 %v1374
        %v1658 = vpop.f32.mrb[0].mxu0
        %v1659 = vadd.f32 %v1406, %v1658
        %v1660 = vpop.f32.mrb[0].mxu0
        %v1661 = vpop.f32.mrb[0].mxu0
        %v1662 = vadd.f32 %v1406, %v1661
        %v1663 = vpop.f32.mrb[0].mxu0
        %1664 = vmatprep.mubr.bf16.mxu0 0
        %1665 = vmatmul.mubr.bf16.gmra.mrb[0].mxu0 %v1375
        %v1666 = vpop.f32.mrb[0].mxu0
        %v1667 = vadd.f32 %v1406, %v1666
        %v1668 = vpop.f32.mrb[0].mxu0
        %v1669 = vpop.f32.mrb[0].mxu0
        %v1670 = vadd.f32 %v1406, %v1669
        %v1671 = vpop.f32.mrb[0].mxu0
        %1672 = vmatprep.mubr.bf16.mxu0 0
        %1673 = vmatmul.mubr.bf16.gmra.mrb[0].mxu0 %v1376
        %v1674 = vpop.f32.mrb[0].mxu0
        %v1675 = vadd.f32 %v1406, %v1674
        %v1676 = vpop.f32.mrb[0].mxu0
        %v1677 = vpop.f32.mrb[0].mxu0
        %v1678 = vadd.f32 %v1406, %v1677
        %v1679 = vpop.f32.mrb[0].mxu0
        %1680 = vmatprep.mubr.bf16.mxu0 0
        %1681 = vmatmul.mubr.bf16.gmra.mrb[0].mxu0 %v1377
        %v1682 = vpop.f32.mrb[0].mxu0
        %v1683 = vadd.f32 %v1406, %v1682
        %v1684 = vpop.f32.mrb[0].mxu0
        %v1685 = vpop.f32.mrb[0].mxu0
        %v1686 = vadd.f32 %v1406, %v1685
        %v1687 = vpop.f32.mrb[0].mxu0
        %1688 = vmatprep.mubr.bf16.mxu0 0
        %1689 = vmatmul.mubr.bf16.gmra.mrb[0].mxu0 %v1378
        %v1690 = vpop.f32.mrb[0].mxu0
        %v1691 = vadd.f32 %v1406, %v1690
        %v1692 = vpop.f32.mrb[0].mxu0
        %v1693 = vpop.f32.mrb[0].mxu0
        %v1694 = vadd.f32 %v1406, %v1693
        %v1695 = vpop.f32.mrb[0].mxu0
        %1696 = vmatprep.mubr.bf16.mxu0 0
        %1697 = vmatmul.mubr.bf16.gmra.mrb[0].mxu0 %v1379
        %v1698 = vpop.f32.mrb[0].mxu0
        %v1699 = vadd.f32 %v1406, %v1698
        %v1700 = vpop.f32.mrb[0].mxu0
        %v1701 = vpop.f32.mrb[0].mxu0
        %v1702 = vadd.f32 %v1406, %v1701
        %v1703 = vpop.f32.mrb[0].mxu0
        %1704 = vmatprep.mubr.bf16.mxu0 0
        %1705 = vmatmul.mubr.bf16.gmra.mrb[0].mxu0 %v1380
        %v1706 = vpop.f32.mrb[0].mxu0
        %v1707 = vadd.f32 %v1406, %v1706
        %v1708 = vpop.f32.mrb[0].mxu0
        %v1709 = vpop.f32.mrb[0].mxu0
        %v1710 = vadd.f32 %v1406, %v1709
        %v1711 = vpop.f32.mrb[0].mxu0
        %1712 = vmatprep.mubr.bf16.mxu0 0
        %1713 = vmatmul.mubr.bf16.gmra.mrb[0].mxu0 %v1381
        %v1714 = vpop.f32.mrb[0].mxu0
        %v1715 = vadd.f32 %v1406, %v1714
        %v1716 = vpop.f32.mrb[0].mxu0
        %v1717 = vpop.f32.mrb[0].mxu0
        %v1718 = vadd.f32 %v1406, %v1717
        %v1719 = vpop.f32.mrb[0].mxu0
        %1720 = vmatprep.mubr.bf16.mxu0 0
        %1721 = vmatmul.mubr.bf16.gmra.mrb[0].mxu0 %v1382
        %v1722 = vpop.f32.mrb[0].mxu0
        %v1723 = vadd.f32 %v1406, %v1722
        %v1724 = vpop.f32.mrb[0].mxu0
        %v1725 = vpop.f32.mrb[0].mxu0
        %v1726 = vadd.f32 %v1406, %v1725
        %v1727 = vpop.f32.mrb[0].mxu0
        %1728 = vmatprep.mubr.bf16.mxu0 0
        %1729 = vmatmul.mubr.bf16.gmra.mrb[0].mxu0 %v1383
        %v1730 = vpop.f32.mrb[0].mxu0
        %v1731 = vadd.f32 %v1406, %v1730
        %v1732 = vpop.f32.mrb[0].mxu0
        %v1733 = vpop.f32.mrb[0].mxu0
        %v1734 = vadd.f32 %v1406, %v1733
        %v1735 = vpop.f32.mrb[0].mxu0
        %1736 = vmatprep.mubr.bf16.mxu0 0
        %1737 = vmatmul.mubr.bf16.gmra.mrb[0].mxu0 %v1384
        %v1738 = vpop.f32.mrb[0].mxu0
        %v1739 = vadd.f32 %v1406, %v1738
        %v1740 = vpop.f32.mrb[0].mxu0
        %v1741 = vpop.f32.mrb[0].mxu0
        %v1742 = vadd.f32 %v1406, %v1741
        %v1743 = vpop.f32.mrb[0].mxu0
        %1744 = vdwg.mxu0
        %vm1745 = vcmask 31744
        %1746 = vst.msk [vmem:[%s280] sm:$0xff] %vm1745, %v1491
        %1747 = vst.msk [vmem:[%s280 + $0x8] sm:$0xff] %vm1745, %v1494
        %1748 = vst.msk [vmem:[%s280 + $0x10] sm:$0xff] %vm1745, %v1499
        %1749 = vst.msk [vmem:[%s280 + $0x18] sm:$0xff] %vm1745, %v1502
        %1750 = vst.msk [vmem:[%s280 + $0x20] sm:$0xff] %vm1745, %v1507
        %1751 = vst.msk [vmem:[%s280 + $0x28] sm:$0xff] %vm1745, %v1510
        %1752 = vst.msk [vmem:[%s280 + $0x30] sm:$0xff] %vm1745, %v1515
        %1753 = vst.msk [vmem:[%s280 + $0x38] sm:$0xff] %vm1745, %v1518
        %1754 = vst.msk [vmem:[%s280 + $0x40] sm:$0xff] %vm1745, %v1523
        %1755 = vst.msk [vmem:[%s280 + $0x48] sm:$0xff] %vm1745, %v1526
        %1756 = vst.msk [vmem:[%s280 + $0x50] sm:$0xff] %vm1745, %v1531
        %1757 = vst.msk [vmem:[%s280 + $0x58] sm:$0xff] %vm1745, %v1534
        %1758 = vst.msk [vmem:[%s280 + $0x60] sm:$0xff] %vm1745, %v1539
        %1759 = vst.msk [vmem:[%s280 + $0x68] sm:$0xff] %vm1745, %v1542
        %1760 = vst.msk [vmem:[%s280 + $0x70] sm:$0xff] %vm1745, %v1547
        %1761 = vst.msk [vmem:[%s280 + $0x78] sm:$0xff] %vm1745, %v1550
        %1762 = vst.msk [vmem:[%s280 + $0x80] sm:$0xff] %vm1745, %v1555
        %1763 = vst.msk [vmem:[%s280 + $0x88] sm:$0xff] %vm1745, %v1558
        %1764 = vst.msk [vmem:[%s280 + $0x90] sm:$0xff] %vm1745, %v1563
        %1765 = vst.msk [vmem:[%s280 + $0x98] sm:$0xff] %vm1745, %v1566
        %1766 = vst.msk [vmem:[%s280 + $0xa0] sm:$0xff] %vm1745, %v1571
        %1767 = vst.msk [vmem:[%s280 + $0xa8] sm:$0xff] %vm1745, %v1574
        %1768 = vst.msk [vmem:[%s280 + $0xb0] sm:$0xff] %vm1745, %v1579
        %1769 = vst.msk [vmem:[%s280 + $0xb8] sm:$0xff] %vm1745, %v1582
        %1770 = vst.msk [vmem:[%s280 + $0xc0] sm:$0xff] %vm1745, %v1587
        %1771 = vst.msk [vmem:[%s280 + $0xc8] sm:$0xff] %vm1745, %v1590
        %1772 = vst.msk [vmem:[%s280 + $0xd0] sm:$0xff] %vm1745, %v1595
        %1773 = vst.msk [vmem:[%s280 + $0xd8] sm:$0xff] %vm1745, %v1598
        %1774 = vst.msk [vmem:[%s280 + $0xe0] sm:$0xff] %vm1745, %v1603
        %1775 = vst.msk [vmem:[%s280 + $0xe8] sm:$0xff] %vm1745, %v1606
        %1776 = vst.msk [vmem:[%s280 + $0xf0] sm:$0xff] %vm1745, %v1611
        %1777 = vst.msk [vmem:[%s280 + $0xf8] sm:$0xff] %vm1745, %v1614
        %1778 = vst.msk [vmem:[%s280 + $0x100] sm:$0xff] %vm1745, %v1619
        %1779 = vst.msk [vmem:[%s280 + $0x108] sm:$0xff] %vm1745, %v1622
        %1780 = vst.msk [vmem:[%s280 + $0x110] sm:$0xff] %vm1745, %v1627
        %1781 = vst.msk [vmem:[%s280 + $0x118] sm:$0xff] %vm1745, %v1630
        %1782 = vst.msk [vmem:[%s280 + $0x120] sm:$0xff] %vm1745, %v1635
        %1783 = vst.msk [vmem:[%s280 + $0x128] sm:$0xff] %vm1745, %v1638
        %1784 = vst.msk [vmem:[%s280 + $0x130] sm:$0xff] %vm1745, %v1643
        %1785 = vst.msk [vmem:[%s280 + $0x138] sm:$0xff] %vm1745, %v1646
        %1786 = vst.msk [vmem:[%s280 + $0x140] sm:$0xff] %vm1745, %v1651
        %1787 = vst.msk [vmem:[%s280 + $0x148] sm:$0xff] %vm1745, %v1654
        %1788 = vst.msk [vmem:[%s280 + $0x150] sm:$0xff] %vm1745, %v1659
        %1789 = vst.msk [vmem:[%s280 + $0x158] sm:$0xff] %vm1745, %v1662
        %1790 = vst.msk [vmem:[%s280 + $0x160] sm:$0xff] %vm1745, %v1667
        %1791 = vst.msk [vmem:[%s280 + $0x168] sm:$0xff] %vm1745, %v1670
        %1792 = vst.msk [vmem:[%s280 + $0x170] sm:$0xff] %vm1745, %v1675
        %1793 = vst.msk [vmem:[%s280 + $0x178] sm:$0xff] %vm1745, %v1678
        %1794 = vst.msk [vmem:[%s280 + $0x180] sm:$0xff] %vm1745, %v1683
        %1795 = vst.msk [vmem:[%s280 + $0x188] sm:$0xff] %vm1745, %v1686
        %1796 = vst.msk [vmem:[%s280 + $0x190] sm:$0xff] %vm1745, %v1691
        %1797 = vst.msk [vmem:[%s280 + $0x198] sm:$0xff] %vm1745, %v1694
        %1798 = vst.msk [vmem:[%s280 + $0x1a0] sm:$0xff] %vm1745, %v1699
        %1799 = vst.msk [vmem:[%s280 + $0x1a8] sm:$0xff] %vm1745, %v1702
        %1800 = vst.msk [vmem:[%s280 + $0x1b0] sm:$0xff] %vm1745, %v1707
        %1801 = vst.msk [vmem:[%s280 + $0x1b8] sm:$0xff] %vm1745, %v1710
        %1802 = vst.msk [vmem:[%s280 + $0x1c0] sm:$0xff] %vm1745, %v1715
        %1803 = vst.msk [vmem:[%s280 + $0x1c8] sm:$0xff] %vm1745, %v1718
        %1804 = vst.msk [vmem:[%s280 + $0x1d0] sm:$0xff] %vm1745, %v1723
        %1805 = vst.msk [vmem:[%s280 + $0x1d8] sm:$0xff] %vm1745, %v1726
        %1806 = vst.msk [vmem:[%s280 + $0x1e0] sm:$0xff] %vm1745, %v1731
        %1807 = vst.msk [vmem:[%s280 + $0x1e8] sm:$0xff] %vm1745, %v1734
        %1808 = vst.msk [vmem:[%s280 + $0x1f0] sm:$0xff] %vm1745, %v1739
        %1809 = vst.msk [vmem:[%s280 + $0x1f8] sm:$0xff] %vm1745, %v1742
        %s1810 = sand.u32 %s178, 1
        %s1811 = sand.u32 %s178, 1
        %s1812 = smul.addr %s1811, 512
        %s1813 = scalar_lea.vmem [#allocation2], %s1812
        // Predicated region
        $region49: #{very_tiny_nerf_forward.1} parent=47 // pred_check
          %p1814 = pneg %p188
        $region50: #{very_tiny_nerf_forward.1} parent=47 // pred_check_branch
          %1816 = sbr.rel (%p1814) target = $region52
        $region51: #{very_tiny_nerf_forward.1} parent=47 // pred_region
          %s1817 = smul.u32 64, %s18
          %s1818 = ssub.s32 125, %s1817
          %p1819 = scmp.lt.s32.totalorder %s1818, 64
          %s1820 = scalar_select %p1819, %s1818, 64
          %s1821 = smul.u32 128, %s1820
          %p1822 = scmp.ne.s32.totalorder 0, %s1821
          %s1823 = smul.addr %s1817, 8
          %s1824 = scalar_lea.vmem %s7, %s1823
          // Predicated region
          $region53: #{very_tiny_nerf_forward.1} parent=51 // pred_check
            %p1825 = pneg %p1822
          $region54: #{very_tiny_nerf_forward.1} parent=51 // pred_check_branch
            %1827 = sbr.rel (%p1825) target = $region56
          $region55: #{very_tiny_nerf_forward.1} parent=51 // pred_region
            // Predicated region
            $region57: #{very_tiny_nerf_forward.1} parent=55 // pred_check
              _
            $region58: #{very_tiny_nerf_forward.1} parent=55 // pred_check_branch
              %1829 = sbr.rel (0) target = $region60
            $region59: #{very_tiny_nerf_forward.1} parent=55 // pred_region
              // Predicated region
              $region79: #{very_tiny_nerf_forward.1} parent=59 // pred_check
                _
              $region80: #{very_tiny_nerf_forward.1} parent=59 // pred_check_branch
                %2004 = sbr.rel (0) target = $region82
              $region81: #{very_tiny_nerf_forward.1} parent=59 // pred_region
                %s2005 = sshrl.u32 %s1820, 6
                // While loop
                $region83: #{very_tiny_nerf_forward.1} parent=81 // loop_pre_header
                  _
                $region84: #{very_tiny_nerf_forward.1} parent=81 // loop_header
                  %s2007 = sphi 0, %s2009
                  %p2008 = scmp.ge.s32.totalorder %s2007, %s2005
                  %s2012 = sphi 0, %s2145
                  %s2013 = sphi %s1813, %s2148
                  %s2014 = sphi %s1824, %s2149
                $region85: #{very_tiny_nerf_forward.1} parent=81 // loop_header_branch
                  %2011 = sbr.rel (%p2008) target = $region89
                $region86: #{very_tiny_nerf_forward.1} parent=81 // loop_body
                  %v2015 = vld [vmem:[%s2013] sm:$0xff]
                  %2016 = vst [vmem:[%s2014] sm:$0xff] %v2015
                  %v2017 = vld [vmem:[%s2013 + $0x8] sm:$0xff]
                  %2018 = vst [vmem:[%s2014 + $0x8] sm:$0xff] %v2017
                  %v2019 = vld [vmem:[%s2013 + $0x10] sm:$0xff]
                  %2020 = vst [vmem:[%s2014 + $0x10] sm:$0xff] %v2019
                  %v2021 = vld [vmem:[%s2013 + $0x18] sm:$0xff]
                  %2022 = vst [vmem:[%s2014 + $0x18] sm:$0xff] %v2021
                  %v2023 = vld [vmem:[%s2013 + $0x20] sm:$0xff]
                  %2024 = vst [vmem:[%s2014 + $0x20] sm:$0xff] %v2023
                  %v2025 = vld [vmem:[%s2013 + $0x28] sm:$0xff]
                  %2026 = vst [vmem:[%s2014 + $0x28] sm:$0xff] %v2025
                  %v2027 = vld [vmem:[%s2013 + $0x30] sm:$0xff]
                  %2028 = vst [vmem:[%s2014 + $0x30] sm:$0xff] %v2027
                  %v2029 = vld [vmem:[%s2013 + $0x38] sm:$0xff]
                  %2030 = vst [vmem:[%s2014 + $0x38] sm:$0xff] %v2029
                  %v2031 = vld [vmem:[%s2013 + $0x40] sm:$0xff]
                  %2032 = vst [vmem:[%s2014 + $0x40] sm:$0xff] %v2031
                  %v2033 = vld [vmem:[%s2013 + $0x48] sm:$0xff]
                  %2034 = vst [vmem:[%s2014 + $0x48] sm:$0xff] %v2033
                  %v2035 = vld [vmem:[%s2013 + $0x50] sm:$0xff]
                  %2036 = vst [vmem:[%s2014 + $0x50] sm:$0xff] %v2035
                  %v2037 = vld [vmem:[%s2013 + $0x58] sm:$0xff]
                  %2038 = vst [vmem:[%s2014 + $0x58] sm:$0xff] %v2037
                  %v2039 = vld [vmem:[%s2013 + $0x60] sm:$0xff]
                  %2040 = vst [vmem:[%s2014 + $0x60] sm:$0xff] %v2039
                  %v2041 = vld [vmem:[%s2013 + $0x68] sm:$0xff]
                  %2042 = vst [vmem:[%s2014 + $0x68] sm:$0xff] %v2041
                  %v2043 = vld [vmem:[%s2013 + $0x70] sm:$0xff]
                  %2044 = vst [vmem:[%s2014 + $0x70] sm:$0xff] %v2043
                  %v2045 = vld [vmem:[%s2013 + $0x78] sm:$0xff]
                  %2046 = vst [vmem:[%s2014 + $0x78] sm:$0xff] %v2045
                  %v2047 = vld [vmem:[%s2013 + $0x80] sm:$0xff]
                  %2048 = vst [vmem:[%s2014 + $0x80] sm:$0xff] %v2047
                  %v2049 = vld [vmem:[%s2013 + $0x88] sm:$0xff]
                  %2050 = vst [vmem:[%s2014 + $0x88] sm:$0xff] %v2049
                  %v2051 = vld [vmem:[%s2013 + $0x90] sm:$0xff]
                  %2052 = vst [vmem:[%s2014 + $0x90] sm:$0xff] %v2051
                  %v2053 = vld [vmem:[%s2013 + $0x98] sm:$0xff]
                  %2054 = vst [vmem:[%s2014 + $0x98] sm:$0xff] %v2053
                  %v2055 = vld [vmem:[%s2013 + $0xa0] sm:$0xff]
                  %2056 = vst [vmem:[%s2014 + $0xa0] sm:$0xff] %v2055
                  %v2057 = vld [vmem:[%s2013 + $0xa8] sm:$0xff]
                  %2058 = vst [vmem:[%s2014 + $0xa8] sm:$0xff] %v2057
                  %v2059 = vld [vmem:[%s2013 + $0xb0] sm:$0xff]
                  %2060 = vst [vmem:[%s2014 + $0xb0] sm:$0xff] %v2059
                  %v2061 = vld [vmem:[%s2013 + $0xb8] sm:$0xff]
                  %2062 = vst [vmem:[%s2014 + $0xb8] sm:$0xff] %v2061
                  %v2063 = vld [vmem:[%s2013 + $0xc0] sm:$0xff]
                  %2064 = vst [vmem:[%s2014 + $0xc0] sm:$0xff] %v2063
                  %v2065 = vld [vmem:[%s2013 + $0xc8] sm:$0xff]
                  %2066 = vst [vmem:[%s2014 + $0xc8] sm:$0xff] %v2065
                  %v2067 = vld [vmem:[%s2013 + $0xd0] sm:$0xff]
                  %2068 = vst [vmem:[%s2014 + $0xd0] sm:$0xff] %v2067
                  %v2069 = vld [vmem:[%s2013 + $0xd8] sm:$0xff]
                  %2070 = vst [vmem:[%s2014 + $0xd8] sm:$0xff] %v2069
                  %v2071 = vld [vmem:[%s2013 + $0xe0] sm:$0xff]
                  %2072 = vst [vmem:[%s2014 + $0xe0] sm:$0xff] %v2071
                  %v2073 = vld [vmem:[%s2013 + $0xe8] sm:$0xff]
                  %2074 = vst [vmem:[%s2014 + $0xe8] sm:$0xff] %v2073
                  %v2075 = vld [vmem:[%s2013 + $0xf0] sm:$0xff]
                  %2076 = vst [vmem:[%s2014 + $0xf0] sm:$0xff] %v2075
                  %v2077 = vld [vmem:[%s2013 + $0xf8] sm:$0xff]
                  %2078 = vst [vmem:[%s2014 + $0xf8] sm:$0xff] %v2077
                  %v2079 = vld [vmem:[%s2013 + $0x100] sm:$0xff]
                  %2080 = vst [vmem:[%s2014 + $0x100] sm:$0xff] %v2079
                  %v2081 = vld [vmem:[%s2013 + $0x108] sm:$0xff]
                  %2082 = vst [vmem:[%s2014 + $0x108] sm:$0xff] %v2081
                  %v2083 = vld [vmem:[%s2013 + $0x110] sm:$0xff]
                  %2084 = vst [vmem:[%s2014 + $0x110] sm:$0xff] %v2083
                  %v2085 = vld [vmem:[%s2013 + $0x118] sm:$0xff]
                  %2086 = vst [vmem:[%s2014 + $0x118] sm:$0xff] %v2085
                  %v2087 = vld [vmem:[%s2013 + $0x120] sm:$0xff]
                  %2088 = vst [vmem:[%s2014 + $0x120] sm:$0xff] %v2087
                  %v2089 = vld [vmem:[%s2013 + $0x128] sm:$0xff]
                  %2090 = vst [vmem:[%s2014 + $0x128] sm:$0xff] %v2089
                  %v2091 = vld [vmem:[%s2013 + $0x130] sm:$0xff]
                  %2092 = vst [vmem:[%s2014 + $0x130] sm:$0xff] %v2091
                  %v2093 = vld [vmem:[%s2013 + $0x138] sm:$0xff]
                  %2094 = vst [vmem:[%s2014 + $0x138] sm:$0xff] %v2093
                  %v2095 = vld [vmem:[%s2013 + $0x140] sm:$0xff]
                  %2096 = vst [vmem:[%s2014 + $0x140] sm:$0xff] %v2095
                  %v2097 = vld [vmem:[%s2013 + $0x148] sm:$0xff]
                  %2098 = vst [vmem:[%s2014 + $0x148] sm:$0xff] %v2097
                  %v2099 = vld [vmem:[%s2013 + $0x150] sm:$0xff]
                  %2100 = vst [vmem:[%s2014 + $0x150] sm:$0xff] %v2099
                  %v2101 = vld [vmem:[%s2013 + $0x158] sm:$0xff]
                  %2102 = vst [vmem:[%s2014 + $0x158] sm:$0xff] %v2101
                  %v2103 = vld [vmem:[%s2013 + $0x160] sm:$0xff]
                  %2104 = vst [vmem:[%s2014 + $0x160] sm:$0xff] %v2103
                  %v2105 = vld [vmem:[%s2013 + $0x168] sm:$0xff]
                  %2106 = vst [vmem:[%s2014 + $0x168] sm:$0xff] %v2105
                  %v2107 = vld [vmem:[%s2013 + $0x170] sm:$0xff]
                  %2108 = vst [vmem:[%s2014 + $0x170] sm:$0xff] %v2107
                  %v2109 = vld [vmem:[%s2013 + $0x178] sm:$0xff]
                  %2110 = vst [vmem:[%s2014 + $0x178] sm:$0xff] %v2109
                  %v2111 = vld [vmem:[%s2013 + $0x180] sm:$0xff]
                  %2112 = vst [vmem:[%s2014 + $0x180] sm:$0xff] %v2111
                  %v2113 = vld [vmem:[%s2013 + $0x188] sm:$0xff]
                  %2114 = vst [vmem:[%s2014 + $0x188] sm:$0xff] %v2113
                  %v2115 = vld [vmem:[%s2013 + $0x190] sm:$0xff]
                  %2116 = vst [vmem:[%s2014 + $0x190] sm:$0xff] %v2115
                  %v2117 = vld [vmem:[%s2013 + $0x198] sm:$0xff]
                  %2118 = vst [vmem:[%s2014 + $0x198] sm:$0xff] %v2117
                  %v2119 = vld [vmem:[%s2013 + $0x1a0] sm:$0xff]
                  %2120 = vst [vmem:[%s2014 + $0x1a0] sm:$0xff] %v2119
                  %v2121 = vld [vmem:[%s2013 + $0x1a8] sm:$0xff]
                  %2122 = vst [vmem:[%s2014 + $0x1a8] sm:$0xff] %v2121
                  %v2123 = vld [vmem:[%s2013 + $0x1b0] sm:$0xff]
                  %2124 = vst [vmem:[%s2014 + $0x1b0] sm:$0xff] %v2123
                  %v2125 = vld [vmem:[%s2013 + $0x1b8] sm:$0xff]
                  %2126 = vst [vmem:[%s2014 + $0x1b8] sm:$0xff] %v2125
                  %v2127 = vld [vmem:[%s2013 + $0x1c0] sm:$0xff]
                  %2128 = vst [vmem:[%s2014 + $0x1c0] sm:$0xff] %v2127
                  %v2129 = vld [vmem:[%s2013 + $0x1c8] sm:$0xff]
                  %2130 = vst [vmem:[%s2014 + $0x1c8] sm:$0xff] %v2129
                  %v2131 = vld [vmem:[%s2013 + $0x1d0] sm:$0xff]
                  %2132 = vst [vmem:[%s2014 + $0x1d0] sm:$0xff] %v2131
                  %v2133 = vld [vmem:[%s2013 + $0x1d8] sm:$0xff]
                  %2134 = vst [vmem:[%s2014 + $0x1d8] sm:$0xff] %v2133
                  %v2135 = vld [vmem:[%s2013 + $0x1e0] sm:$0xff]
                  %2136 = vst [vmem:[%s2014 + $0x1e0] sm:$0xff] %v2135
                  %v2137 = vld [vmem:[%s2013 + $0x1e8] sm:$0xff]
                  %2138 = vst [vmem:[%s2014 + $0x1e8] sm:$0xff] %v2137
                  %v2139 = vld [vmem:[%s2013 + $0x1f0] sm:$0xff]
                  %2140 = vst [vmem:[%s2014 + $0x1f0] sm:$0xff] %v2139
                  %v2141 = vld [vmem:[%s2013 + $0x1f8] sm:$0xff]
                  %2142 = vst [vmem:[%s2014 + $0x1f8] sm:$0xff] %v2141
                  %s2143 = sadd.s32 1, %s2012
                  %p2144 = scmp.ge.s32.totalorder %s2143, %s2005
                  %s2145 = scalar_select %p2144, 0, %s2143
                  %s2146 = smul.u32 %s2145, 512
                  %s2147 = smul.u32 %s2145, 512
                  %s2148 = scalar_lea.vmem %s1813, %s2146 [#allocation2]
                  %s2149 = scalar_lea.vmem %s1824, %s2147
                $region87: #{very_tiny_nerf_forward.1} parent=81 // loop_footer
                  %s2009 = sadd.s32 %s2007, 1
                $region88: #{very_tiny_nerf_forward.1} parent=81 // loop_footer_branch
                  %2006 = sbr.rel target = $region84
                $region89: #{very_tiny_nerf_forward.1} parent=81 // loop_exit
                  _
                %s2150 = sshrl.u32 %s1820, 6
                %s2151 = sand.u32 %s1820, 63
                %s2152 = smul.u32 %s2150, 64
                %s2153 = smul.u32 8, %s2152
                %s2154 = scalar_lea.vmem %s1813, %s2153 [#allocation2]
                %s2155 = smul.u32 8, %s2152
                %s2156 = scalar_lea.vmem %s1824, %s2155
                // While loop
                $region90: #{very_tiny_nerf_forward.1} parent=81 // loop_pre_header
                  _
                $region91: #{very_tiny_nerf_forward.1} parent=81 // loop_header
                  %s2158 = sphi 0, %s2160
                  %p2159 = scmp.ge.s32.totalorder %s2158, %s2151
                  %s2163 = sphi 0, %s2170
                  %s2164 = sphi %s2154, %s2173
                  %s2165 = sphi %s2156, %s2174
                $region92: #{very_tiny_nerf_forward.1} parent=81 // loop_header_branch
                  %2162 = sbr.rel (%p2159) target = $region96
                $region93: #{very_tiny_nerf_forward.1} parent=81 // loop_body
                  %v2166 = vld [vmem:[%s2164] sm:$0xff]
                  %2167 = vst [vmem:[%s2165] sm:$0xff] %v2166
                  %s2168 = sadd.s32 1, %s2163
                  %p2169 = scmp.ge.s32.totalorder %s2168, %s2151
                  %s2170 = scalar_select %p2169, 0, %s2168
                  %s2171 = smul.u32 %s2170, 8
                  %s2172 = smul.u32 %s2170, 8
                  %s2173 = scalar_lea.vmem %s2154, %s2171 [#allocation2]
                  %s2174 = scalar_lea.vmem %s2156, %s2172
                $region94: #{very_tiny_nerf_forward.1} parent=81 // loop_footer
                  %s2160 = sadd.s32 %s2158, 1
                $region95: #{very_tiny_nerf_forward.1} parent=81 // loop_footer_branch
                  %2157 = sbr.rel target = $region91
                $region96: #{very_tiny_nerf_forward.1} parent=81 // loop_exit
                  _
              $region82: #{very_tiny_nerf_forward.1} parent=59 // pred_fallthru
                _
              // Predicated region
              $region97: #{very_tiny_nerf_forward.1} parent=59 // pred_check
                _
              $region98: #{very_tiny_nerf_forward.1} parent=59 // pred_check_branch
                %2176 = sbr.rel target = $region100
              $region99: #{very_tiny_nerf_forward.1} parent=59 // pred_region
                _
              $region100: #{very_tiny_nerf_forward.1} parent=59 // pred_fallthru
                _
            $region60: #{very_tiny_nerf_forward.1} parent=55 // pred_fallthru
              _
            // Predicated region
            $region61: #{very_tiny_nerf_forward.1} parent=55 // pred_check
              _
            $region62: #{very_tiny_nerf_forward.1} parent=55 // pred_check_branch
              %1831 = sbr.rel target = $region64
            $region63: #{very_tiny_nerf_forward.1} parent=55 // pred_region
              %s1833 = sshrl.u32 %s1820, 6
              // While loop
              $region65: #{very_tiny_nerf_forward.1} parent=63 // loop_pre_header
                _
              $region66: #{very_tiny_nerf_forward.1} parent=63 // loop_header
                %s1835 = sphi 0, %s1837
                %p1836 = scmp.ge.s32.totalorder %s1835, %s1833
                %s1840 = sphi 0, %s1973
                %s1841 = sphi %s1813, %s1976
                %s1842 = sphi %s1824, %s1977
              $region67: #{very_tiny_nerf_forward.1} parent=63 // loop_header_branch
                %1839 = sbr.rel (%p1836) target = $region71
              $region68: #{very_tiny_nerf_forward.1} parent=63 // loop_body
                %v1843 = vld [vmem:[%s1841] sm:$0xff]
                %1844 = vst [vmem:[%s1842] sm:$0xff] %v1843
                %v1845 = vld [vmem:[%s1841 + $0x8] sm:$0xff]
                %1846 = vst [vmem:[%s1842 + $0x8] sm:$0xff] %v1845
                %v1847 = vld [vmem:[%s1841 + $0x10] sm:$0xff]
                %1848 = vst [vmem:[%s1842 + $0x10] sm:$0xff] %v1847
                %v1849 = vld [vmem:[%s1841 + $0x18] sm:$0xff]
                %1850 = vst [vmem:[%s1842 + $0x18] sm:$0xff] %v1849
                %v1851 = vld [vmem:[%s1841 + $0x20] sm:$0xff]
                %1852 = vst [vmem:[%s1842 + $0x20] sm:$0xff] %v1851
                %v1853 = vld [vmem:[%s1841 + $0x28] sm:$0xff]
                %1854 = vst [vmem:[%s1842 + $0x28] sm:$0xff] %v1853
                %v1855 = vld [vmem:[%s1841 + $0x30] sm:$0xff]
                %1856 = vst [vmem:[%s1842 + $0x30] sm:$0xff] %v1855
                %v1857 = vld [vmem:[%s1841 + $0x38] sm:$0xff]
                %1858 = vst [vmem:[%s1842 + $0x38] sm:$0xff] %v1857
                %v1859 = vld [vmem:[%s1841 + $0x40] sm:$0xff]
                %1860 = vst [vmem:[%s1842 + $0x40] sm:$0xff] %v1859
                %v1861 = vld [vmem:[%s1841 + $0x48] sm:$0xff]
                %1862 = vst [vmem:[%s1842 + $0x48] sm:$0xff] %v1861
                %v1863 = vld [vmem:[%s1841 + $0x50] sm:$0xff]
                %1864 = vst [vmem:[%s1842 + $0x50] sm:$0xff] %v1863
                %v1865 = vld [vmem:[%s1841 + $0x58] sm:$0xff]
                %1866 = vst [vmem:[%s1842 + $0x58] sm:$0xff] %v1865
                %v1867 = vld [vmem:[%s1841 + $0x60] sm:$0xff]
                %1868 = vst [vmem:[%s1842 + $0x60] sm:$0xff] %v1867
                %v1869 = vld [vmem:[%s1841 + $0x68] sm:$0xff]
                %1870 = vst [vmem:[%s1842 + $0x68] sm:$0xff] %v1869
                %v1871 = vld [vmem:[%s1841 + $0x70] sm:$0xff]
                %1872 = vst [vmem:[%s1842 + $0x70] sm:$0xff] %v1871
                %v1873 = vld [vmem:[%s1841 + $0x78] sm:$0xff]
                %1874 = vst [vmem:[%s1842 + $0x78] sm:$0xff] %v1873
                %v1875 = vld [vmem:[%s1841 + $0x80] sm:$0xff]
                %1876 = vst [vmem:[%s1842 + $0x80] sm:$0xff] %v1875
                %v1877 = vld [vmem:[%s1841 + $0x88] sm:$0xff]
                %1878 = vst [vmem:[%s1842 + $0x88] sm:$0xff] %v1877
                %v1879 = vld [vmem:[%s1841 + $0x90] sm:$0xff]
                %1880 = vst [vmem:[%s1842 + $0x90] sm:$0xff] %v1879
                %v1881 = vld [vmem:[%s1841 + $0x98] sm:$0xff]
                %1882 = vst [vmem:[%s1842 + $0x98] sm:$0xff] %v1881
                %v1883 = vld [vmem:[%s1841 + $0xa0] sm:$0xff]
                %1884 = vst [vmem:[%s1842 + $0xa0] sm:$0xff] %v1883
                %v1885 = vld [vmem:[%s1841 + $0xa8] sm:$0xff]
                %1886 = vst [vmem:[%s1842 + $0xa8] sm:$0xff] %v1885
                %v1887 = vld [vmem:[%s1841 + $0xb0] sm:$0xff]
                %1888 = vst [vmem:[%s1842 + $0xb0] sm:$0xff] %v1887
                %v1889 = vld [vmem:[%s1841 + $0xb8] sm:$0xff]
                %1890 = vst [vmem:[%s1842 + $0xb8] sm:$0xff] %v1889
                %v1891 = vld [vmem:[%s1841 + $0xc0] sm:$0xff]
                %1892 = vst [vmem:[%s1842 + $0xc0] sm:$0xff] %v1891
                %v1893 = vld [vmem:[%s1841 + $0xc8] sm:$0xff]
                %1894 = vst [vmem:[%s1842 + $0xc8] sm:$0xff] %v1893
                %v1895 = vld [vmem:[%s1841 + $0xd0] sm:$0xff]
                %1896 = vst [vmem:[%s1842 + $0xd0] sm:$0xff] %v1895
                %v1897 = vld [vmem:[%s1841 + $0xd8] sm:$0xff]
                %1898 = vst [vmem:[%s1842 + $0xd8] sm:$0xff] %v1897
                %v1899 = vld [vmem:[%s1841 + $0xe0] sm:$0xff]
                %1900 = vst [vmem:[%s1842 + $0xe0] sm:$0xff] %v1899
                %v1901 = vld [vmem:[%s1841 + $0xe8] sm:$0xff]
                %1902 = vst [vmem:[%s1842 + $0xe8] sm:$0xff] %v1901
                %v1903 = vld [vmem:[%s1841 + $0xf0] sm:$0xff]
                %1904 = vst [vmem:[%s1842 + $0xf0] sm:$0xff] %v1903
                %v1905 = vld [vmem:[%s1841 + $0xf8] sm:$0xff]
                %1906 = vst [vmem:[%s1842 + $0xf8] sm:$0xff] %v1905
                %v1907 = vld [vmem:[%s1841 + $0x100] sm:$0xff]
                %1908 = vst [vmem:[%s1842 + $0x100] sm:$0xff] %v1907
                %v1909 = vld [vmem:[%s1841 + $0x108] sm:$0xff]
                %1910 = vst [vmem:[%s1842 + $0x108] sm:$0xff] %v1909
                %v1911 = vld [vmem:[%s1841 + $0x110] sm:$0xff]
                %1912 = vst [vmem:[%s1842 + $0x110] sm:$0xff] %v1911
                %v1913 = vld [vmem:[%s1841 + $0x118] sm:$0xff]
                %1914 = vst [vmem:[%s1842 + $0x118] sm:$0xff] %v1913
                %v1915 = vld [vmem:[%s1841 + $0x120] sm:$0xff]
                %1916 = vst [vmem:[%s1842 + $0x120] sm:$0xff] %v1915
                %v1917 = vld [vmem:[%s1841 + $0x128] sm:$0xff]
                %1918 = vst [vmem:[%s1842 + $0x128] sm:$0xff] %v1917
                %v1919 = vld [vmem:[%s1841 + $0x130] sm:$0xff]
                %1920 = vst [vmem:[%s1842 + $0x130] sm:$0xff] %v1919
                %v1921 = vld [vmem:[%s1841 + $0x138] sm:$0xff]
                %1922 = vst [vmem:[%s1842 + $0x138] sm:$0xff] %v1921
                %v1923 = vld [vmem:[%s1841 + $0x140] sm:$0xff]
                %1924 = vst [vmem:[%s1842 + $0x140] sm:$0xff] %v1923
                %v1925 = vld [vmem:[%s1841 + $0x148] sm:$0xff]
                %1926 = vst [vmem:[%s1842 + $0x148] sm:$0xff] %v1925
                %v1927 = vld [vmem:[%s1841 + $0x150] sm:$0xff]
                %1928 = vst [vmem:[%s1842 + $0x150] sm:$0xff] %v1927
                %v1929 = vld [vmem:[%s1841 + $0x158] sm:$0xff]
                %1930 = vst [vmem:[%s1842 + $0x158] sm:$0xff] %v1929
                %v1931 = vld [vmem:[%s1841 + $0x160] sm:$0xff]
                %1932 = vst [vmem:[%s1842 + $0x160] sm:$0xff] %v1931
                %v1933 = vld [vmem:[%s1841 + $0x168] sm:$0xff]
                %1934 = vst [vmem:[%s1842 + $0x168] sm:$0xff] %v1933
                %v1935 = vld [vmem:[%s1841 + $0x170] sm:$0xff]
                %1936 = vst [vmem:[%s1842 + $0x170] sm:$0xff] %v1935
                %v1937 = vld [vmem:[%s1841 + $0x178] sm:$0xff]
                %1938 = vst [vmem:[%s1842 + $0x178] sm:$0xff] %v1937
                %v1939 = vld [vmem:[%s1841 + $0x180] sm:$0xff]
                %1940 = vst [vmem:[%s1842 + $0x180] sm:$0xff] %v1939
                %v1941 = vld [vmem:[%s1841 + $0x188] sm:$0xff]
                %1942 = vst [vmem:[%s1842 + $0x188] sm:$0xff] %v1941
                %v1943 = vld [vmem:[%s1841 + $0x190] sm:$0xff]
                %1944 = vst [vmem:[%s1842 + $0x190] sm:$0xff] %v1943
                %v1945 = vld [vmem:[%s1841 + $0x198] sm:$0xff]
                %1946 = vst [vmem:[%s1842 + $0x198] sm:$0xff] %v1945
                %v1947 = vld [vmem:[%s1841 + $0x1a0] sm:$0xff]
                %1948 = vst [vmem:[%s1842 + $0x1a0] sm:$0xff] %v1947
                %v1949 = vld [vmem:[%s1841 + $0x1a8] sm:$0xff]
                %1950 = vst [vmem:[%s1842 + $0x1a8] sm:$0xff] %v1949
                %v1951 = vld [vmem:[%s1841 + $0x1b0] sm:$0xff]
                %1952 = vst [vmem:[%s1842 + $0x1b0] sm:$0xff] %v1951
                %v1953 = vld [vmem:[%s1841 + $0x1b8] sm:$0xff]
                %1954 = vst [vmem:[%s1842 + $0x1b8] sm:$0xff] %v1953
                %v1955 = vld [vmem:[%s1841 + $0x1c0] sm:$0xff]
                %1956 = vst [vmem:[%s1842 + $0x1c0] sm:$0xff] %v1955
                %v1957 = vld [vmem:[%s1841 + $0x1c8] sm:$0xff]
                %1958 = vst [vmem:[%s1842 + $0x1c8] sm:$0xff] %v1957
                %v1959 = vld [vmem:[%s1841 + $0x1d0] sm:$0xff]
                %1960 = vst [vmem:[%s1842 + $0x1d0] sm:$0xff] %v1959
                %v1961 = vld [vmem:[%s1841 + $0x1d8] sm:$0xff]
                %1962 = vst [vmem:[%s1842 + $0x1d8] sm:$0xff] %v1961
                %v1963 = vld [vmem:[%s1841 + $0x1e0] sm:$0xff]
                %1964 = vst [vmem:[%s1842 + $0x1e0] sm:$0xff] %v1963
                %v1965 = vld [vmem:[%s1841 + $0x1e8] sm:$0xff]
                %1966 = vst [vmem:[%s1842 + $0x1e8] sm:$0xff] %v1965
                %v1967 = vld [vmem:[%s1841 + $0x1f0] sm:$0xff]
                %1968 = vst [vmem:[%s1842 + $0x1f0] sm:$0xff] %v1967
                %v1969 = vld [vmem:[%s1841 + $0x1f8] sm:$0xff]
                %1970 = vst [vmem:[%s1842 + $0x1f8] sm:$0xff] %v1969
                %s1971 = sadd.s32 1, %s1840
                %p1972 = scmp.ge.s32.totalorder %s1971, %s1833
                %s1973 = scalar_select %p1972, 0, %s1971
                %s1974 = smul.u32 %s1973, 512
                %s1975 = smul.u32 %s1973, 512
                %s1976 = scalar_lea.vmem %s1813, %s1974 [#allocation2]
                %s1977 = scalar_lea.vmem %s1824, %s1975
              $region69: #{very_tiny_nerf_forward.1} parent=63 // loop_footer
                %s1837 = sadd.s32 %s1835, 1
              $region70: #{very_tiny_nerf_forward.1} parent=63 // loop_footer_branch
                %1834 = sbr.rel target = $region66
              $region71: #{very_tiny_nerf_forward.1} parent=63 // loop_exit
                _
              %s1978 = sshrl.u32 %s1820, 6
              %s1979 = sand.u32 %s1820, 63
              %s1980 = smul.u32 %s1978, 64
              %s1981 = smul.u32 8, %s1980
              %s1982 = scalar_lea.vmem %s1813, %s1981 [#allocation2]
              %s1983 = smul.u32 8, %s1980
              %s1984 = scalar_lea.vmem %s1824, %s1983
              // While loop
              $region72: #{very_tiny_nerf_forward.1} parent=63 // loop_pre_header
                _
              $region73: #{very_tiny_nerf_forward.1} parent=63 // loop_header
                %s1986 = sphi 0, %s1988
                %p1987 = scmp.ge.s32.totalorder %s1986, %s1979
                %s1991 = sphi 0, %s1998
                %s1992 = sphi %s1982, %s2001
                %s1993 = sphi %s1984, %s2002
              $region74: #{very_tiny_nerf_forward.1} parent=63 // loop_header_branch
                %1990 = sbr.rel (%p1987) target = $region78
              $region75: #{very_tiny_nerf_forward.1} parent=63 // loop_body
                %v1994 = vld [vmem:[%s1992] sm:$0xff]
                %1995 = vst [vmem:[%s1993] sm:$0xff] %v1994
                %s1996 = sadd.s32 1, %s1991
                %p1997 = scmp.ge.s32.totalorder %s1996, %s1979
                %s1998 = scalar_select %p1997, 0, %s1996
                %s1999 = smul.u32 %s1998, 8
                %s2000 = smul.u32 %s1998, 8
                %s2001 = scalar_lea.vmem %s1982, %s1999 [#allocation2]
                %s2002 = scalar_lea.vmem %s1984, %s2000
              $region76: #{very_tiny_nerf_forward.1} parent=63 // loop_footer
                %s1988 = sadd.s32 %s1986, 1
              $region77: #{very_tiny_nerf_forward.1} parent=63 // loop_footer_branch
                %1985 = sbr.rel target = $region73
              $region78: #{very_tiny_nerf_forward.1} parent=63 // loop_exit
                _
            $region64: #{very_tiny_nerf_forward.1} parent=55 // pred_fallthru
              _
          $region56: #{very_tiny_nerf_forward.1} parent=51 // pred_fallthru
            _
          %2177 = vnop
        $region52: #{very_tiny_nerf_forward.1} parent=47 // pred_fallthru
          _
      $region48: #{very_tiny_nerf_forward.1} parent=5 // pred_fallthru
        _
      %p2178 = scmp.le.s32.totalorder 2, %s13
      // Predicated region
      $region101: #{very_tiny_nerf_forward.1} parent=5 // pred_check
        %p2179 = pneg %p2178
      $region102: #{very_tiny_nerf_forward.1} parent=5 // pred_check_branch
        %2181 = sbr.rel (%p2179) target = $region104
      $region103: #{very_tiny_nerf_forward.1} parent=5 // pred_region
        %s2182 = ssub.s32 %s13, 2
        // Predicated region
        $region105: #{very_tiny_nerf_forward.1} parent=103 // pred_check
          %p2183 = pneg %p194
        $region106: #{very_tiny_nerf_forward.1} parent=103 // pred_check_branch
          %2185 = sbr.rel (%p2183) target = $region108
        $region107: #{very_tiny_nerf_forward.1} parent=103 // pred_region
          %s2186 = sand.u32 %s179, 1
          %s2187 = sand.u32 %s179, 1
          %s2188 = smul.addr %s2187, 512
          %s2189 = scalar_lea.vmem [#allocation2], %s2188
        $region108: #{very_tiny_nerf_forward.1} parent=103 // pred_fallthru
          _
      $region104: #{very_tiny_nerf_forward.1} parent=5 // pred_fallthru
        _
    $region6: #{very_tiny_nerf_forward.1} parent=1 // loop_footer
      %s17 = sadd.s32 1, %s13
    $region7: #{very_tiny_nerf_forward.1} parent=1 // loop_footer_branch
      %12 = sbr.rel target = $region3
    $region8: #{very_tiny_nerf_forward.1} parent=1 // loop_exit
      _

</llo_original>
